<compile_context>
chip_gen: v7x
topology: tpu7x:2x2x1
jax: 0.10.0
libtpu: 0.0.40
codegen_flags: <defaults>
</compile_context>

<pallas_src>
import functools

import numpy as np
import jax
import jax.numpy as jnp
from jax.experimental import pallas as pl
from jax.experimental.pallas import tpu as pltpu

# ---- config (mirrors `config` in the PyTorch script; small synthetic sizes) ----
INPUT_DIM = 40
NB_HIDDENS = 32
OUTPUT_DIM = 20
THRESHOLD = 1.0

ALPHA_LIM = (float(np.exp(-1.0 / 5.0)), float(np.exp(-1.0 / 25.0)))
BETA_LIM = (float(np.exp(-1.0 / 30.0)), float(np.exp(-1.0 / 120.0)))
A_LIM = (-1.0, 1.0)
B_LIM = (0.0, 2.0)


# ----------------------------- fused SNN kernel ---------------------------------
def snn_chunk_kernel(x_ref, Ww_ref, Wb_ref, V_ref,
                     alpha_ref, beta_ref, a_ref, b_ref,
                     Wrw_ref, Wrb_ref, alphar_ref,
                     ut0_ref, wt0_ref, st0_ref, utr0_ref,
                     out_ref, fr_ref, s_ref,
                     ut_sc, wt_sc, st_sc, utr_sc, fr_sc, oacc_sc, s_slab,
                     *, chunk_t, batch, total_steps):
    """One time-chunk: input projection -> RadLIF recurrence -> batched readout
    projection -> leaky-integrator/softmax accumulation.  State carried in VMEM
    scratch across chunks."""
    c = pl.program_id(0)

    # ---- init carried state on the first chunk ---------------------------------
    @pl.when(c == 0)
    def _init():
        ut_sc[...] = ut0_ref[...]
        wt_sc[...] = wt0_ref[...]
        st_sc[...] = st0_ref[...]
        utr_sc[...] = utr0_ref[...]
        fr_sc[...] = jnp.zeros_like(fr_sc)
        oacc_sc[...] = jnp.zeros_like(oacc_sc)

    # ---- chunk-invariant parameter transforms (cheap VPU work) -----------------
    alpha = jnp.clip(alpha_ref[...], ALPHA_LIM[0], ALPHA_LIM[1])
    beta = jnp.clip(beta_ref[...], BETA_LIM[0], BETA_LIM[1])
    a_ = jnp.clip(a_ref[...], A_LIM[0], A_LIM[1])
    b_ = jnp.clip(b_ref[...], B_LIM[0], B_LIM[1])
    one_m_alpha = 1.0 - alpha
    v = V_ref[...]                        # bf16 (H, H), diagonal already zeroed
    wr = Wrw_ref[...]                     # bf16 (H, O)
    wrb = Wrb_ref[...]                    # f32  (1, O)
    # Faithful to PyTorch readout_cell: RAW alpha on the leak term, CLAMPED alpha
    # only inside the (1 - alpha_) input factor.
    alpha_r_raw = alphar_ref[...]
    one_m_alpha_r = 1.0 - jnp.clip(alpha_r_raw, ALPHA_LIM[0], ALPHA_LIM[1])

    # ---- stage 1: input projection for this chunk (one bf16 MXU matmul) --------
    wx = jnp.dot(x_ref[...], Ww_ref[...],
                 preferred_element_type=jnp.float32) + Wb_ref[...]   # (cT*B, H) f32

    # ---- stage 2: RadLIF recurrence (serial over time; f32 state math) ---------
    ut = ut_sc[...]
    wt = wt_sc[...]
    st = st_sc[...]
    fr_acc = fr_sc[...]
    for t in range(chunk_t):
        wt = beta * wt + a_ * ut + b_ * st
        rec = jnp.dot(st.astype(jnp.bfloat16), v,
                      preferred_element_type=jnp.float32)
        ut = alpha * (ut - st) + one_m_alpha * (
            wx[t * batch:(t + 1) * batch, :] + rec - wt)
        st = jnp.where(ut - THRESHOLD > 0.0, 1.0, 0.0)       # boxcar forward
        s_slab[t * batch:(t + 1) * batch, :] = st            # VMEM staging slab
        fr_acc = fr_acc + st                                  # cheap VPU add
    ut_sc[...] = ut
    wt_sc[...] = wt
    st_sc[...] = st
    fr_sc[...] = fr_acc

    # dense (chunk_T*B, H) spike slab: single bf16 store + single readout matmul
    s_chunk = s_slab[...].astype(jnp.bfloat16)
    s_ref[...] = s_chunk

    # ---- stage 3: readout projection hoisted out of the time loop --------------
    wxr = jnp.dot(s_chunk, wr, preferred_element_type=jnp.float32) + wrb

    # ---- stage 4: leaky integrator + softmax accumulation (VPU/EUP/XLU only) ---
    ut_r = utr_sc[...]
    out_acc = oacc_sc[...]
    for t in range(chunk_t):
        ut_r = alpha_r_raw * ut_r + one_m_alpha_r * wxr[t * batch:(t + 1) * batch, :]
        m = jnp.max(ut_r, axis=-1, keepdims=True)
        e = jnp.exp(ut_r - m)
        out_acc = out_acc + e / jnp.sum(e, axis=-1, keepdims=True)
    utr_sc[...] = ut_r
    oacc_sc[...] = out_acc

    # ---- finalize on the last chunk: single HBM writeback of out / fr ----------
    @pl.when(c == pl.num_programs(0) - 1)
    def _finalize():
        out_ref[...] = oacc_sc[...]
        fr_ref[...] = jnp.sum(fr_sc[...], axis=0, keepdims=True) * (
            1.0 / float(total_steps))


def _pick_chunk_t(nt, bsz, target_rows=512):
    """Largest divisor c < nt of nt such that c*bsz is a sublane multiple and the
    chunk row count stays <= target_rows; falls back to the full sequence."""
    cands = [c for c in range(1, nt)
             if nt % c == 0 and (c * bsz) % 8 == 0 and c * bsz <= target_rows]
    return max(cands) if cands else nt


def snn_fused(x_tbd, Ww, Wb, V, alpha, beta, a, b, Wrw, Wrb, alpha_read,
              ut0, wt0, st0, utr0):
    nt, bsz, din = x_tbd.shape
    h = Ww.shape[1]
    o = Wrw.shape[1]

    chunk_t = _pick_chunk_t(nt, bsz)
    n_chunks = nt // chunk_t
    rows = chunk_t * bsz

    # 2-D time-major layout and bf16 MXU operands (cast once, outside the kernel)
    x_2d = x_tbd.reshape(nt * bsz, din).astype(jnp.bfloat16)
    Ww_bf = Ww.astype(jnp.bfloat16)
    V_bf = V.astype(jnp.bfloat16)
    Wr_bf = Wrw.astype(jnp.bfloat16)

    kernel = functools.partial(snn_chunk_kernel, chunk_t=chunk_t, batch=bsz,
                               total_steps=nt * bsz)

    grid_spec = pltpu.PrefetchScalarGridSpec(
        num_scalar_prefetch=0,
        grid=(n_chunks,),
        in_specs=[
            pl.BlockSpec((rows, din), lambda c: (c, 0)),      # x (time-chunked)
            pl.BlockSpec((din, h), lambda c: (0, 0)),          # W weight
            pl.BlockSpec((1, h), lambda c: (0, 0)),            # W bias
            pl.BlockSpec((h, h), lambda c: (0, 0)),            # V (diag zeroed)
            pl.BlockSpec((1, h), lambda c: (0, 0)),            # alpha
            pl.BlockSpec((1, h), lambda c: (0, 0)),            # beta
            pl.BlockSpec((1, h), lambda c: (0, 0)),            # a
            pl.BlockSpec((1, h), lambda c: (0, 0)),            # b
            pl.BlockSpec((h, o), lambda c: (0, 0)),            # W_read weight
            pl.BlockSpec((1, o), lambda c: (0, 0)),            # W_read bias
            pl.BlockSpec((1, o), lambda c: (0, 0)),            # alpha_read
            pl.BlockSpec((bsz, h), lambda c: (0, 0)),          # ut0
            pl.BlockSpec((bsz, h), lambda c: (0, 0)),          # wt0
            pl.BlockSpec((bsz, h), lambda c: (0, 0)),          # st0
            pl.BlockSpec((bsz, o), lambda c: (0, 0)),          # ut_read0
        ],
        out_specs=(
            pl.BlockSpec((bsz, o), lambda c: (0, 0)),          # readout (resident)
            pl.BlockSpec((1, h), lambda c: (0, 0)),            # firing rates
            pl.BlockSpec((rows, h), lambda c: (c, 0)),         # spikes (chunked)
        ),
        scratch_shapes=[
            pltpu.VMEM((bsz, h), jnp.float32),   # ut carry
            pltpu.VMEM((bsz, h), jnp.float32),   # wt carry
            pltpu.VMEM((bsz, h), jnp.float32),   # st carry
            pltpu.VMEM((bsz, o), jnp.float32),   # ut_read carry
            pltpu.VMEM((bsz, h), jnp.float32),   # firing-rate accumulator
            pltpu.VMEM((bsz, o), jnp.float32),   # softmax-sum accumulator
            pltpu.VMEM((rows, h), jnp.float32),  # per-chunk spike staging slab
        ],
    )

    out, fr, s_2d = pl.pallas_call(
        kernel,
        out_shape=(jax.ShapeDtypeStruct((bsz, o), jnp.float32),        # readout
                   jax.ShapeDtypeStruct((1, h), jnp.float32),          # firing rates
                   jax.ShapeDtypeStruct((nt * bsz, h), jnp.bfloat16)), # spikes
        grid_spec=grid_spec,
        compiler_params=pltpu.CompilerParams(
            dimension_semantics=("arbitrary",)),   # time chunks are sequential
    )(x_2d, Ww_bf, Wb.reshape(1, h), V_bf,
      alpha.reshape(1, h), beta.reshape(1, h), a.reshape(1, h), b.reshape(1, h),
      Wr_bf, Wrb.reshape(1, o), alpha_read.reshape(1, o),
      ut0, wt0, st0, utr0)
    return out, fr, s_2d


# ------------------------------ parameter init ----------------------------------
def init_params(key):
    din, h, o = INPUT_DIM, NB_HIDDENS, OUTPUT_DIM
    ks = jax.random.split(key, 10)
    lim_w = 1.0 / np.sqrt(din)
    lim_r = 1.0 / np.sqrt(h)
    # W: Linear(input_dim, nb_hiddens, bias=True); stored as (D, H) so y = x @ W + b
    W_w = jax.random.uniform(ks[0], (din, h), jnp.float32, -lim_w, lim_w)
    W_b = jax.random.uniform(ks[1], (h,), jnp.float32, -lim_w, lim_w)
    # V: Linear(H, H, bias=False), orthogonal init (as nn.init.orthogonal_)
    q, r = jnp.linalg.qr(jax.random.normal(ks[2], (h, h), jnp.float32))
    V_w = q * jnp.sign(jnp.diag(r))
    alpha = jax.random.uniform(ks[3], (h,), jnp.float32, ALPHA_LIM[0], ALPHA_LIM[1])
    beta = jax.random.uniform(ks[4], (h,), jnp.float32, BETA_LIM[0], BETA_LIM[1])
    a = jax.random.uniform(ks[5], (h,), jnp.float32, A_LIM[0], A_LIM[1])
    b = jax.random.uniform(ks[6], (h,), jnp.float32, B_LIM[0], B_LIM[1])
    # W_read: Linear(H, O, bias=True)
    Wr_w = jax.random.uniform(ks[7], (h, o), jnp.float32, -lim_r, lim_r)
    Wr_b = jax.random.uniform(ks[8], (o,), jnp.float32, -lim_r, lim_r)
    alpha_read = jax.random.uniform(ks[9], (o,), jnp.float32,
                                    ALPHA_LIM[0], ALPHA_LIM[1])
    return dict(W_w=W_w, W_b=W_b, V_w=V_w, alpha=alpha, beta=beta, a=a, b=b,
                Wr_w=Wr_w, Wr_b=Wr_b, alpha_read=alpha_read)


# --------------------------------- forward --------------------------------------
def snn_forward(params, x_btd, mask=None, states_key=None):
    """x_btd: (batch, time, input_dim), matching the PyTorch (batch, time, feat)."""
    del mask  # accepted but never used in the PyTorch forward either
    bsz, nt, din = x_btd.shape
    h, o = NB_HIDDENS, OUTPUT_DIM
    if states_key is None:
        states_key = jax.random.PRNGKey(1)
    k = jax.random.split(states_key, 4)

    # time-major input for the kernel
    x_tbd = jnp.transpose(x_btd, (1, 0, 2))

    # random initial states (PyTorch uses torch.rand -> U[0,1); deterministic here)
    ut0 = jax.random.uniform(k[0], (bsz, h), jnp.float32)
    wt0 = jax.random.uniform(k[1], (bsz, h), jnp.float32)
    st0 = jax.random.uniform(k[2], (bsz, h), jnp.float32)
    ut0_r = jax.random.uniform(k[3], (bsz, o), jnp.float32)

    # V_ = V.weight with diagonal zeroed (parameter prep = glue)
    v = params["V_w"] * (1.0 - jnp.eye(h, dtype=jnp.float32))

    # normalization == None -> self.normalize False -> norm layers skipped;
    # self.drop(s) at inference is the identity.
    out, fr, s_2d = snn_fused(
        x_tbd, params["W_w"], params["W_b"], v,
        params["alpha"], params["beta"], params["a"], params["b"],
        params["Wr_w"], params["Wr_b"], params["alpha_read"],
        ut0, wt0, st0, ut0_r)

    spikes_bth = jnp.transpose(
        s_2d.reshape(nt, bsz, h), (1, 0, 2)).astype(jnp.float32)  # (batch, time, H)
    firing_rates = fr.reshape(h)                   # (num_layers * feats,) = (H,)
    return out, firing_rates, [spikes_bth]


if __name__ == "__main__":
    key = jax.random.PRNGKey(0)
    kp, kx, ks = jax.random.split(key, 3)
    params = init_params(kp)

    B, T = 2, 8
    x = jax.random.uniform(kx, (B, T, INPUT_DIM), dtype=jnp.float32)
    mask = jnp.ones((B, T), jnp.float32)  # unused, mirrors the PyTorch signature

    fwd = jax.jit(snn_forward)
    out, firing_rates, all_spikes = fwd(params, x, mask, ks)
    jax.block_until_ready((out, firing_rates, all_spikes))

    assert out.shape == (B, OUTPUT_DIM)
    assert firing_rates.shape == (NB_HIDDENS,)
    assert all_spikes[0].shape == (B, T, NB_HIDDENS)
    assert bool(jnp.all(jnp.isfinite(out)))
    assert bool(jnp.all(jnp.isfinite(firing_rates)))
    print("KERNEL_OK")
</pallas_src>

<mosaic_0001>
module attributes {stable_mosaic.version = 11 : i64} {
  func.func @snn_chunk_kernel(%arg0: i32, %arg1: memref<8x40xbf16, #tpu.memory_space<vmem>>, %arg2: memref<40x32xbf16, #tpu.memory_space<vmem>>, %arg3: memref<1x32xf32, #tpu.memory_space<vmem>>, %arg4: memref<32x32xbf16, #tpu.memory_space<vmem>>, %arg5: memref<1x32xf32, #tpu.memory_space<vmem>>, %arg6: memref<1x32xf32, #tpu.memory_space<vmem>>, %arg7: memref<1x32xf32, #tpu.memory_space<vmem>>, %arg8: memref<1x32xf32, #tpu.memory_space<vmem>>, %arg9: memref<32x20xbf16, #tpu.memory_space<vmem>>, %arg10: memref<1x20xf32, #tpu.memory_space<vmem>>, %arg11: memref<1x20xf32, #tpu.memory_space<vmem>>, %arg12: memref<2x32xf32, #tpu.memory_space<vmem>>, %arg13: memref<2x32xf32, #tpu.memory_space<vmem>>, %arg14: memref<2x32xf32, #tpu.memory_space<vmem>>, %arg15: memref<2x20xf32, #tpu.memory_space<vmem>>, %arg16: memref<2x20xf32, #tpu.memory_space<vmem>>, %arg17: memref<1x32xf32, #tpu.memory_space<vmem>>, %arg18: memref<8x32xbf16, #tpu.memory_space<vmem>>, %arg19: memref<2x32xf32, #tpu.memory_space<vmem>>, %arg20: memref<2x32xf32, #tpu.memory_space<vmem>>, %arg21: memref<2x32xf32, #tpu.memory_space<vmem>>, %arg22: memref<2x20xf32, #tpu.memory_space<vmem>>, %arg23: memref<2x32xf32, #tpu.memory_space<vmem>>, %arg24: memref<2x20xf32, #tpu.memory_space<vmem>>, %arg25: memref<8x32xf32, #tpu.memory_space<vmem>>) attributes {dimension_semantics = [#tpu.dimension_semantics<arbitrary>], iteration_bounds = array<i64: 2>, scalar_prefetch = 0 : i64, scratch_operands = 7 : i64, tpu.core_type = #tpu.core_type<tc>, window_params = [{transform_indices = @transform_0, window_bounds = array<i64: 8, 40>}, {pipeline_mode = #tpu.pipeline_mode<synchronous>, transform_indices = @transform_1, window_bounds = array<i64: 40, 32>}, {pipeline_mode = #tpu.pipeline_mode<synchronous>, transform_indices = @transform_2, window_bounds = array<i64: 1, 32>}, {pipeline_mode = #tpu.pipeline_mode<synchronous>, transform_indices = @transform_3, window_bounds = array<i64: 32, 32>}, {pipeline_mode = #tpu.pipeline_mode<synchronous>, transform_indices = @transform_4, window_bounds = array<i64: 1, 32>}, {pipeline_mode = #tpu.pipeline_mode<synchronous>, transform_indices = @transform_5, window_bounds = array<i64: 1, 32>}, {pipeline_mode = #tpu.pipeline_mode<synchronous>, transform_indices = @transform_6, window_bounds = array<i64: 1, 32>}, {pipeline_mode = #tpu.pipeline_mode<synchronous>, transform_indices = @transform_7, window_bounds = array<i64: 1, 32>}, {pipeline_mode = #tpu.pipeline_mode<synchronous>, transform_indices = @transform_8, window_bounds = array<i64: 32, 20>}, {pipeline_mode = #tpu.pipeline_mode<synchronous>, transform_indices = @transform_9, window_bounds = array<i64: 1, 20>}, {pipeline_mode = #tpu.pipeline_mode<synchronous>, transform_indices = @transform_10, window_bounds = array<i64: 1, 20>}, {pipeline_mode = #tpu.pipeline_mode<synchronous>, transform_indices = @transform_11, window_bounds = array<i64: 2, 32>}, {pipeline_mode = #tpu.pipeline_mode<synchronous>, transform_indices = @transform_12, window_bounds = array<i64: 2, 32>}, {pipeline_mode = #tpu.pipeline_mode<synchronous>, transform_indices = @transform_13, window_bounds = array<i64: 2, 32>}, {pipeline_mode = #tpu.pipeline_mode<synchronous>, transform_indices = @transform_14, window_bounds = array<i64: 2, 20>}, {pipeline_mode = #tpu.pipeline_mode<synchronous>, transform_indices = @transform_15, window_bounds = array<i64: 2, 20>}, {pipeline_mode = #tpu.pipeline_mode<synchronous>, transform_indices = @transform_16, window_bounds = array<i64: 1, 32>}, {transform_indices = @transform_17, window_bounds = array<i64: 8, 32>}]} {
    %c0_i32 = arith.constant 0 : i32
    %0 = arith.cmpi eq, %arg0, %c0_i32 : i32
    %1 = arith.extui %0 : i1 to i32
    %c0_i32_0 = arith.constant 0 : i32
    %2 = arith.cmpi ne, %1, %c0_i32_0 : i32
    scf.if %2 {
      %c0_97 = arith.constant 0 : index
      %c0_98 = arith.constant 0 : index
      %238 = vector.load %arg12[%c0_97, %c0_98] : memref<2x32xf32, #tpu.memory_space<vmem>>, vector<2x32xf32>
      %c0_99 = arith.constant 0 : index
      %c0_100 = arith.constant 0 : index
      %239 = vector.load %arg19[%c0_99, %c0_100] : memref<2x32xf32, #tpu.memory_space<vmem>>, vector<2x32xf32>
      tpu.vector_store %arg19[%c0_99, %c0_100], %238 {strides = array<i32>} : memref<2x32xf32, #tpu.memory_space<vmem>>, vector<2x32xf32>,
      %c0_101 = arith.constant 0 : index
      %c0_102 = arith.constant 0 : index
      %240 = vector.load %arg13[%c0_101, %c0_102] : memref<2x32xf32, #tpu.memory_space<vmem>>, vector<2x32xf32>
      %c0_103 = arith.constant 0 : index
      %c0_104 = arith.constant 0 : index
      %241 = vector.load %arg20[%c0_103, %c0_104] : memref<2x32xf32, #tpu.memory_space<vmem>>, vector<2x32xf32>
      tpu.vector_store %arg20[%c0_103, %c0_104], %240 {strides = array<i32>} : memref<2x32xf32, #tpu.memory_space<vmem>>, vector<2x32xf32>,
      %c0_105 = arith.constant 0 : index
      %c0_106 = arith.constant 0 : index
      %242 = vector.load %arg14[%c0_105, %c0_106] : memref<2x32xf32, #tpu.memory_space<vmem>>, vector<2x32xf32>
      %c0_107 = arith.constant 0 : index
      %c0_108 = arith.constant 0 : index
      %243 = vector.load %arg21[%c0_107, %c0_108] : memref<2x32xf32, #tpu.memory_space<vmem>>, vector<2x32xf32>
      tpu.vector_store %arg21[%c0_107, %c0_108], %242 {strides = array<i32>} : memref<2x32xf32, #tpu.memory_space<vmem>>, vector<2x32xf32>,
      %c0_109 = arith.constant 0 : index
      %c0_110 = arith.constant 0 : index
      %244 = vector.load %arg15[%c0_109, %c0_110] : memref<2x20xf32, #tpu.memory_space<vmem>>, vector<2x20xf32>
      %c0_111 = arith.constant 0 : index
      %c0_112 = arith.constant 0 : index
      %245 = vector.load %arg22[%c0_111, %c0_112] : memref<2x20xf32, #tpu.memory_space<vmem>>, vector<2x20xf32>
      tpu.vector_store %arg22[%c0_111, %c0_112], %244 {strides = array<i32>} : memref<2x20xf32, #tpu.memory_space<vmem>>, vector<2x20xf32>,
      %cst_113 = arith.constant 0.000000e+00 : f32
      %246 = vector.broadcast %cst_113 : f32 to vector<2x32xf32>
      %c0_114 = arith.constant 0 : index
      %c0_115 = arith.constant 0 : index
      %247 = vector.load %arg23[%c0_114, %c0_115] : memref<2x32xf32, #tpu.memory_space<vmem>>, vector<2x32xf32>
      tpu.vector_store %arg23[%c0_114, %c0_115], %246 {strides = array<i32>} : memref<2x32xf32, #tpu.memory_space<vmem>>, vector<2x32xf32>,
      %cst_116 = arith.constant 0.000000e+00 : f32
      %248 = vector.broadcast %cst_116 : f32 to vector<2x20xf32>
      %c0_117 = arith.constant 0 : index
      %c0_118 = arith.constant 0 : index
      %249 = vector.load %arg24[%c0_117, %c0_118] : memref<2x20xf32, #tpu.memory_space<vmem>>, vector<2x20xf32>
      tpu.vector_store %arg24[%c0_117, %c0_118], %248 {strides = array<i32>} : memref<2x20xf32, #tpu.memory_space<vmem>>, vector<2x20xf32>,
    } else {
    }
    %c0 = arith.constant 0 : index
    %c0_1 = arith.constant 0 : index
    %3 = vector.load %arg5[%c0, %c0_1] : memref<1x32xf32, #tpu.memory_space<vmem>>, vector<1x32xf32>
    %cst = arith.constant 0.818730771 : f32
    %cst_2 = arith.constant 0.960789442 : f32
    %4 = vector.broadcast %cst : f32 to vector<1x32xf32>
    %5 = arith.maximumf %4, %3 : vector<1x32xf32>
    %6 = vector.broadcast %cst_2 : f32 to vector<1x32xf32>
    %7 = arith.minimumf %6, %5 : vector<1x32xf32>
    %c0_3 = arith.constant 0 : index
    %c0_4 = arith.constant 0 : index
    %8 = vector.load %arg6[%c0_3, %c0_4] : memref<1x32xf32, #tpu.memory_space<vmem>>, vector<1x32xf32>
    %cst_5 = arith.constant 0.967216074 : f32
    %cst_6 = arith.constant 0.991701304 : f32
    %9 = vector.broadcast %cst_5 : f32 to vector<1x32xf32>
    %10 = arith.maximumf %9, %8 : vector<1x32xf32>
    %11 = vector.broadcast %cst_6 : f32 to vector<1x32xf32>
    %12 = arith.minimumf %11, %10 : vector<1x32xf32>
    %c0_7 = arith.constant 0 : index
    %c0_8 = arith.constant 0 : index
    %13 = vector.load %arg7[%c0_7, %c0_8] : memref<1x32xf32, #tpu.memory_space<vmem>>, vector<1x32xf32>
    %cst_9 = arith.constant -1.000000e+00 : f32
    %cst_10 = arith.constant 1.000000e+00 : f32
    %14 = vector.broadcast %cst_9 : f32 to vector<1x32xf32>
    %15 = arith.maximumf %14, %13 : vector<1x32xf32>
    %16 = vector.broadcast %cst_10 : f32 to vector<1x32xf32>
    %17 = arith.minimumf %16, %15 : vector<1x32xf32>
    %c0_11 = arith.constant 0 : index
    %c0_12 = arith.constant 0 : index
    %18 = vector.load %arg8[%c0_11, %c0_12] : memref<1x32xf32, #tpu.memory_space<vmem>>, vector<1x32xf32>
    %cst_13 = arith.constant 0.000000e+00 : f32
    %cst_14 = arith.constant 2.000000e+00 : f32
    %19 = vector.broadcast %cst_13 : f32 to vector<1x32xf32>
    %20 = arith.maximumf %19, %18 : vector<1x32xf32>
    %21 = vector.broadcast %cst_14 : f32 to vector<1x32xf32>
    %22 = arith.minimumf %21, %20 : vector<1x32xf32>
    %cst_15 = arith.constant 1.000000e+00 : f32
    %23 = vector.broadcast %cst_15 : f32 to vector<1x32xf32>
    %24 = arith.subf %23, %7 : vector<1x32xf32>
    %c0_16 = arith.constant 0 : index
    %c0_17 = arith.constant 0 : index
    %25 = vector.load %arg4[%c0_16, %c0_17] : memref<32x32xbf16, #tpu.memory_space<vmem>>, vector<32x32xbf16>
    %c0_18 = arith.constant 0 : index
    %c0_19 = arith.constant 0 : index
    %26 = vector.load %arg9[%c0_18, %c0_19] : memref<32x20xbf16, #tpu.memory_space<vmem>>, vector<32x20xbf16>
    %c0_20 = arith.constant 0 : index
    %c0_21 = arith.constant 0 : index
    %27 = vector.load %arg10[%c0_20, %c0_21] : memref<1x20xf32, #tpu.memory_space<vmem>>, vector<1x20xf32>
    %c0_22 = arith.constant 0 : index
    %c0_23 = arith.constant 0 : index
    %28 = vector.load %arg11[%c0_22, %c0_23] : memref<1x20xf32, #tpu.memory_space<vmem>>, vector<1x20xf32>
    %cst_24 = arith.constant 0.818730771 : f32
    %cst_25 = arith.constant 0.960789442 : f32
    %29 = vector.broadcast %cst_24 : f32 to vector<1x20xf32>
    %30 = arith.maximumf %29, %28 : vector<1x20xf32>
    %31 = vector.broadcast %cst_25 : f32 to vector<1x20xf32>
    %32 = arith.minimumf %31, %30 : vector<1x20xf32>
    %cst_26 = arith.constant 1.000000e+00 : f32
    %33 = vector.broadcast %cst_26 : f32 to vector<1x20xf32>
    %34 = arith.subf %33, %32 : vector<1x20xf32>
    %c0_27 = arith.constant 0 : index
    %c0_28 = arith.constant 0 : index
    %35 = vector.load %arg1[%c0_27, %c0_28] : memref<8x40xbf16, #tpu.memory_space<vmem>>, vector<8x40xbf16>
    %c0_29 = arith.constant 0 : index
    %c0_30 = arith.constant 0 : index
    %36 = vector.load %arg2[%c0_29, %c0_30] : memref<40x32xbf16, #tpu.memory_space<vmem>>, vector<40x32xbf16>
    %cst_31 = arith.constant dense<0.000000e+00> : vector<8x32xf32>
    %37 = tpu.matmul %35, %36, %cst_31 {dimension_numbers = #tpu.dot_dimension_numbers<[1], [0], [0], [1], [0, 0, 1, 1], [], []>} : vector<8x40xbf16>, vector<40x32xbf16>, vector<8x32xf32> -> vector<8x32xf32>
    %c0_32 = arith.constant 0 : index
    %c0_33 = arith.constant 0 : index
    %38 = vector.load %arg3[%c0_32, %c0_33] : memref<1x32xf32, #tpu.memory_space<vmem>>, vector<1x32xf32>
    %39 = vector.broadcast %38 : vector<1x32xf32> to vector<8x32xf32>
    %40 = arith.addf %37, %39 : vector<8x32xf32>
    %c0_34 = arith.constant 0 : index
    %c0_35 = arith.constant 0 : index
    %41 = vector.load %arg19[%c0_34, %c0_35] : memref<2x32xf32, #tpu.memory_space<vmem>>, vector<2x32xf32>
    %c0_36 = arith.constant 0 : index
    %c0_37 = arith.constant 0 : index
    %42 = vector.load %arg20[%c0_36, %c0_37] : memref<2x32xf32, #tpu.memory_space<vmem>>, vector<2x32xf32>
    %c0_38 = arith.constant 0 : index
    %c0_39 = arith.constant 0 : index
    %43 = vector.load %arg21[%c0_38, %c0_39] : memref<2x32xf32, #tpu.memory_space<vmem>>, vector<2x32xf32>
    %c0_40 = arith.constant 0 : index
    %c0_41 = arith.constant 0 : index
    %44 = vector.load %arg23[%c0_40, %c0_41] : memref<2x32xf32, #tpu.memory_space<vmem>>, vector<2x32xf32>
    %45 = vector.broadcast %12 : vector<1x32xf32> to vector<2x32xf32>
    %46 = arith.mulf %45, %42 : vector<2x32xf32>
    %47 = vector.broadcast %17 : vector<1x32xf32> to vector<2x32xf32>
    %48 = arith.mulf %47, %41 : vector<2x32xf32>
    %49 = arith.addf %46, %48 : vector<2x32xf32>
    %50 = vector.broadcast %22 : vector<1x32xf32> to vector<2x32xf32>
    %51 = arith.mulf %50, %43 : vector<2x32xf32>
    %52 = arith.addf %49, %51 : vector<2x32xf32>
    %53 = arith.truncf %43 : vector<2x32xf32> to vector<2x32xbf16>
    %cst_42 = arith.constant dense<0.000000e+00> : vector<2x32xf32>
    %54 = tpu.matmul %53, %25, %cst_42 {dimension_numbers = #tpu.dot_dimension_numbers<[1], [0], [0], [1], [0, 0, 1, 1], [], []>} : vector<2x32xbf16>, vector<32x32xbf16>, vector<2x32xf32> -> vector<2x32xf32>
    %55 = arith.subf %41, %43 : vector<2x32xf32>
    %56 = vector.broadcast %7 : vector<1x32xf32> to vector<2x32xf32>
    %57 = arith.mulf %56, %55 : vector<2x32xf32>
    %58 = vector.extract_strided_slice %40 {offsets = [0, 0], sizes = [2, 32], strides = [1, 1]} : vector<8x32xf32> to vector<2x32xf32>
    %59 = arith.addf %58, %54 : vector<2x32xf32>
    %60 = arith.subf %59, %52 : vector<2x32xf32>
    %61 = vector.broadcast %24 : vector<1x32xf32> to vector<2x32xf32>
    %62 = arith.mulf %61, %60 : vector<2x32xf32>
    %63 = arith.addf %57, %62 : vector<2x32xf32>
    %cst_43 = arith.constant 1.000000e+00 : f32
    %64 = vector.broadcast %cst_43 : f32 to vector<2x32xf32>
    %65 = arith.subf %63, %64 : vector<2x32xf32>
    %cst_44 = arith.constant 0.000000e+00 : f32
    %66 = vector.broadcast %cst_44 : f32 to vector<2x32xf32>
    %67 = arith.cmpf ogt, %65, %66 : vector<2x32xf32>
    %cst_45 = arith.constant 1.000000e+00 : f32
    %cst_46 = arith.constant 0.000000e+00 : f32
    %68 = vector.broadcast %cst_45 : f32 to vector<2x32xf32>
    %69 = vector.broadcast %cst_46 : f32 to vector<2x32xf32>
    %70 = arith.select %67, %68, %69 : vector<2x32xi1>, vector<2x32xf32>
    %c0_47 = arith.constant 0 : index
    %c0_48 = arith.constant 0 : index
    %71 = vector.load %arg25[%c0_47, %c0_48] : memref<8x32xf32, #tpu.memory_space<vmem>>, vector<2x32xf32>
    tpu.vector_store %arg25[%c0_47, %c0_48], %70 {strides = array<i32>} : memref<8x32xf32, #tpu.memory_space<vmem>>, vector<2x32xf32>,
    %72 = arith.addf %44, %70 : vector<2x32xf32>
    %73 = vector.broadcast %12 : vector<1x32xf32> to vector<2x32xf32>
    %74 = arith.mulf %73, %52 : vector<2x32xf32>
    %75 = vector.broadcast %17 : vector<1x32xf32> to vector<2x32xf32>
    %76 = arith.mulf %75, %63 : vector<2x32xf32>
    %77 = arith.addf %74, %76 : vector<2x32xf32>
    %78 = vector.broadcast %22 : vector<1x32xf32> to vector<2x32xf32>
    %79 = arith.mulf %78, %70 : vector<2x32xf32>
    %80 = arith.addf %77, %79 : vector<2x32xf32>
    %81 = arith.truncf %70 : vector<2x32xf32> to vector<2x32xbf16>
    %cst_49 = arith.constant dense<0.000000e+00> : vector<2x32xf32>
    %82 = tpu.matmul %81, %25, %cst_49 {dimension_numbers = #tpu.dot_dimension_numbers<[1], [0], [0], [1], [0, 0, 1, 1], [], []>} : vector<2x32xbf16>, vector<32x32xbf16>, vector<2x32xf32> -> vector<2x32xf32>
    %83 = arith.subf %63, %70 : vector<2x32xf32>
    %84 = vector.broadcast %7 : vector<1x32xf32> to vector<2x32xf32>
    %85 = arith.mulf %84, %83 : vector<2x32xf32>
    %86 = vector.extract_strided_slice %40 {offsets = [2, 0], sizes = [2, 32], strides = [1, 1]} : vector<8x32xf32> to vector<2x32xf32>
    %87 = arith.addf %86, %82 : vector<2x32xf32>
    %88 = arith.subf %87, %80 : vector<2x32xf32>
    %89 = vector.broadcast %24 : vector<1x32xf32> to vector<2x32xf32>
    %90 = arith.mulf %89, %88 : vector<2x32xf32>
    %91 = arith.addf %85, %90 : vector<2x32xf32>
    %cst_50 = arith.constant 1.000000e+00 : f32
    %92 = vector.broadcast %cst_50 : f32 to vector<2x32xf32>
    %93 = arith.subf %91, %92 : vector<2x32xf32>
    %cst_51 = arith.constant 0.000000e+00 : f32
    %94 = vector.broadcast %cst_51 : f32 to vector<2x32xf32>
    %95 = arith.cmpf ogt, %93, %94 : vector<2x32xf32>
    %cst_52 = arith.constant 1.000000e+00 : f32
    %cst_53 = arith.constant 0.000000e+00 : f32
    %96 = vector.broadcast %cst_52 : f32 to vector<2x32xf32>
    %97 = vector.broadcast %cst_53 : f32 to vector<2x32xf32>
    %98 = arith.select %95, %96, %97 : vector<2x32xi1>, vector<2x32xf32>
    %c2 = arith.constant 2 : index
    %c0_54 = arith.constant 0 : index
    %99 = vector.load %arg25[%c2, %c0_54] : memref<8x32xf32, #tpu.memory_space<vmem>>, vector<2x32xf32>
    tpu.vector_store %arg25[%c2, %c0_54], %98 {strides = array<i32>} : memref<8x32xf32, #tpu.memory_space<vmem>>, vector<2x32xf32>,
    %100 = arith.addf %72, %98 : vector<2x32xf32>
    %101 = vector.broadcast %12 : vector<1x32xf32> to vector<2x32xf32>
    %102 = arith.mulf %101, %80 : vector<2x32xf32>
    %103 = vector.broadcast %17 : vector<1x32xf32> to vector<2x32xf32>
    %104 = arith.mulf %103, %91 : vector<2x32xf32>
    %105 = arith.addf %102, %104 : vector<2x32xf32>
    %106 = vector.broadcast %22 : vector<1x32xf32> to vector<2x32xf32>
    %107 = arith.mulf %106, %98 : vector<2x32xf32>
    %108 = arith.addf %105, %107 : vector<2x32xf32>
    %109 = arith.truncf %98 : vector<2x32xf32> to vector<2x32xbf16>
    %cst_55 = arith.constant dense<0.000000e+00> : vector<2x32xf32>
    %110 = tpu.matmul %109, %25, %cst_55 {dimension_numbers = #tpu.dot_dimension_numbers<[1], [0], [0], [1], [0, 0, 1, 1], [], []>} : vector<2x32xbf16>, vector<32x32xbf16>, vector<2x32xf32> -> vector<2x32xf32>
    %111 = arith.subf %91, %98 : vector<2x32xf32>
    %112 = vector.broadcast %7 : vector<1x32xf32> to vector<2x32xf32>
    %113 = arith.mulf %112, %111 : vector<2x32xf32>
    %114 = vector.extract_strided_slice %40 {offsets = [4, 0], sizes = [2, 32], strides = [1, 1]} : vector<8x32xf32> to vector<2x32xf32>
    %115 = arith.addf %114, %110 : vector<2x32xf32>
    %116 = arith.subf %115, %108 : vector<2x32xf32>
    %117 = vector.broadcast %24 : vector<1x32xf32> to vector<2x32xf32>
    %118 = arith.mulf %117, %116 : vector<2x32xf32>
    %119 = arith.addf %113, %118 : vector<2x32xf32>
    %cst_56 = arith.constant 1.000000e+00 : f32
    %120 = vector.broadcast %cst_56 : f32 to vector<2x32xf32>
    %121 = arith.subf %119, %120 : vector<2x32xf32>
    %cst_57 = arith.constant 0.000000e+00 : f32
    %122 = vector.broadcast %cst_57 : f32 to vector<2x32xf32>
    %123 = arith.cmpf ogt, %121, %122 : vector<2x32xf32>
    %cst_58 = arith.constant 1.000000e+00 : f32
    %cst_59 = arith.constant 0.000000e+00 : f32
    %124 = vector.broadcast %cst_58 : f32 to vector<2x32xf32>
    %125 = vector.broadcast %cst_59 : f32 to vector<2x32xf32>
    %126 = arith.select %123, %124, %125 : vector<2x32xi1>, vector<2x32xf32>
    %c4 = arith.constant 4 : index
    %c0_60 = arith.constant 0 : index
    %127 = vector.load %arg25[%c4, %c0_60] : memref<8x32xf32, #tpu.memory_space<vmem>>, vector<2x32xf32>
    tpu.vector_store %arg25[%c4, %c0_60], %126 {strides = array<i32>} : memref<8x32xf32, #tpu.memory_space<vmem>>, vector<2x32xf32>,
    %128 = arith.addf %100, %126 : vector<2x32xf32>
    %129 = vector.broadcast %12 : vector<1x32xf32> to vector<2x32xf32>
    %130 = arith.mulf %129, %108 : vector<2x32xf32>
    %131 = vector.broadcast %17 : vector<1x32xf32> to vector<2x32xf32>
    %132 = arith.mulf %131, %119 : vector<2x32xf32>
    %133 = arith.addf %130, %132 : vector<2x32xf32>
    %134 = vector.broadcast %22 : vector<1x32xf32> to vector<2x32xf32>
    %135 = arith.mulf %134, %126 : vector<2x32xf32>
    %136 = arith.addf %133, %135 : vector<2x32xf32>
    %137 = arith.truncf %126 : vector<2x32xf32> to vector<2x32xbf16>
    %cst_61 = arith.constant dense<0.000000e+00> : vector<2x32xf32>
    %138 = tpu.matmul %137, %25, %cst_61 {dimension_numbers = #tpu.dot_dimension_numbers<[1], [0], [0], [1], [0, 0, 1, 1], [], []>} : vector<2x32xbf16>, vector<32x32xbf16>, vector<2x32xf32> -> vector<2x32xf32>
    %139 = arith.subf %119, %126 : vector<2x32xf32>
    %140 = vector.broadcast %7 : vector<1x32xf32> to vector<2x32xf32>
    %141 = arith.mulf %140, %139 : vector<2x32xf32>
    %142 = vector.extract_strided_slice %40 {offsets = [6, 0], sizes = [2, 32], strides = [1, 1]} : vector<8x32xf32> to vector<2x32xf32>
    %143 = arith.addf %142, %138 : vector<2x32xf32>
    %144 = arith.subf %143, %136 : vector<2x32xf32>
    %145 = vector.broadcast %24 : vector<1x32xf32> to vector<2x32xf32>
    %146 = arith.mulf %145, %144 : vector<2x32xf32>
    %147 = arith.addf %141, %146 : vector<2x32xf32>
    %cst_62 = arith.constant 1.000000e+00 : f32
    %148 = vector.broadcast %cst_62 : f32 to vector<2x32xf32>
    %149 = arith.subf %147, %148 : vector<2x32xf32>
    %cst_63 = arith.constant 0.000000e+00 : f32
    %150 = vector.broadcast %cst_63 : f32 to vector<2x32xf32>
    %151 = arith.cmpf ogt, %149, %150 : vector<2x32xf32>
    %cst_64 = arith.constant 1.000000e+00 : f32
    %cst_65 = arith.constant 0.000000e+00 : f32
    %152 = vector.broadcast %cst_64 : f32 to vector<2x32xf32>
    %153 = vector.broadcast %cst_65 : f32 to vector<2x32xf32>
    %154 = arith.select %151, %152, %153 : vector<2x32xi1>, vector<2x32xf32>
    %c6 = arith.constant 6 : index
    %c0_66 = arith.constant 0 : index
    %155 = vector.load %arg25[%c6, %c0_66] : memref<8x32xf32, #tpu.memory_space<vmem>>, vector<2x32xf32>
    tpu.vector_store %arg25[%c6, %c0_66], %154 {strides = array<i32>} : memref<8x32xf32, #tpu.memory_space<vmem>>, vector<2x32xf32>,
    %156 = arith.addf %128, %154 : vector<2x32xf32>
    %c0_67 = arith.constant 0 : index
    %c0_68 = arith.constant 0 : index
    %157 = vector.load %arg19[%c0_67, %c0_68] : memref<2x32xf32, #tpu.memory_space<vmem>>, vector<2x32xf32>
    tpu.vector_store %arg19[%c0_67, %c0_68], %147 {strides = array<i32>} : memref<2x32xf32, #tpu.memory_space<vmem>>, vector<2x32xf32>,
    %c0_69 = arith.constant 0 : index
    %c0_70 = arith.constant 0 : index
    %158 = vector.load %arg20[%c0_69, %c0_70] : memref<2x32xf32, #tpu.memory_space<vmem>>, vector<2x32xf32>
    tpu.vector_store %arg20[%c0_69, %c0_70], %136 {strides = array<i32>} : memref<2x32xf32, #tpu.memory_space<vmem>>, vector<2x32xf32>,
    %c0_71 = arith.constant 0 : index
    %c0_72 = arith.constant 0 : index
    %159 = vector.load %arg21[%c0_71, %c0_72] : memref<2x32xf32, #tpu.memory_space<vmem>>, vector<2x32xf32>
    tpu.vector_store %arg21[%c0_71, %c0_72], %154 {strides = array<i32>} : memref<2x32xf32, #tpu.memory_space<vmem>>, vector<2x32xf32>,
    %c0_73 = arith.constant 0 : index
    %c0_74 = arith.constant 0 : index
    %160 = vector.load %arg23[%c0_73, %c0_74] : memref<2x32xf32, #tpu.memory_space<vmem>>, vector<2x32xf32>
    tpu.vector_store %arg23[%c0_73, %c0_74], %156 {strides = array<i32>} : memref<2x32xf32, #tpu.memory_space<vmem>>, vector<2x32xf32>,
    %c0_75 = arith.constant 0 : index
    %c0_76 = arith.constant 0 : index
    %161 = vector.load %arg25[%c0_75, %c0_76] : memref<8x32xf32, #tpu.memory_space<vmem>>, vector<8x32xf32>
    %162 = arith.truncf %161 : vector<8x32xf32> to vector<8x32xbf16>
    %c0_77 = arith.constant 0 : index
    %c0_78 = arith.constant 0 : index
    %163 = vector.load %arg18[%c0_77, %c0_78] : memref<8x32xbf16, #tpu.memory_space<vmem>>, vector<8x32xbf16>
    tpu.vector_store %arg18[%c0_77, %c0_78], %162 {strides = array<i32>} : memref<8x32xbf16, #tpu.memory_space<vmem>>, vector<8x32xbf16>,
    %cst_79 = arith.constant dense<0.000000e+00> : vector<8x20xf32>
    %164 = tpu.matmul %162, %26, %cst_79 {dimension_numbers = #tpu.dot_dimension_numbers<[1], [0], [0], [1], [0, 0, 1, 1], [], []>} : vector<8x32xbf16>, vector<32x20xbf16>, vector<8x20xf32> -> vector<8x20xf32>
    %165 = vector.broadcast %27 : vector<1x20xf32> to vector<8x20xf32>
    %166 = arith.addf %164, %165 : vector<8x20xf32>
    %c0_80 = arith.constant 0 : index
    %c0_81 = arith.constant 0 : index
    %167 = vector.load %arg22[%c0_80, %c0_81] : memref<2x20xf32, #tpu.memory_space<vmem>>, vector<2x20xf32>
    %c0_82 = arith.constant 0 : index
    %c0_83 = arith.constant 0 : index
    %168 = vector.load %arg24[%c0_82, %c0_83] : memref<2x20xf32, #tpu.memory_space<vmem>>, vector<2x20xf32>
    %169 = vector.broadcast %28 : vector<1x20xf32> to vector<2x20xf32>
    %170 = arith.mulf %169, %167 : vector<2x20xf32>
    %171 = vector.extract_strided_slice %166 {offsets = [0, 0], sizes = [2, 20], strides = [1, 1]} : vector<8x20xf32> to vector<2x20xf32>
    %172 = vector.broadcast %34 : vector<1x20xf32> to vector<2x20xf32>
    %173 = arith.mulf %172, %171 : vector<2x20xf32>
    %174 = arith.addf %170, %173 : vector<2x20xf32>
    %cst_84 = arith.constant dense<0xFF800000> : vector<2xf32>
    %175 = vector.multi_reduction <maximumf>, %174, %cst_84 [1] : vector<2x20xf32> to vector<2xf32>
    %176 = vector.shape_cast %175 : vector<2xf32> to vector<2x1xf32>
    %177 = vector.broadcast %176 : vector<2x1xf32> to vector<2x20xf32>
    %178 = arith.subf %174, %177 : vector<2x20xf32>
    %179 = math.exp %178 : vector<2x20xf32>
    %cst_85 = arith.constant dense<0.000000e+00> : vector<2xf32>
    %180 = vector.multi_reduction <add>, %179, %cst_85 [1] : vector<2x20xf32> to vector<2xf32>
    %181 = vector.shape_cast %180 : vector<2xf32> to vector<2x1xf32>
    %182 = vector.broadcast %181 : vector<2x1xf32> to vector<2x20xf32>
    %183 = arith.divf %179, %182 : vector<2x20xf32>
    %184 = arith.addf %168, %183 : vector<2x20xf32>
    %185 = vector.broadcast %28 : vector<1x20xf32> to vector<2x20xf32>
    %186 = arith.mulf %185, %174 : vector<2x20xf32>
    %187 = vector.extract_strided_slice %166 {offsets = [2, 0], sizes = [2, 20], strides = [1, 1]} : vector<8x20xf32> to vector<2x20xf32>
    %188 = vector.broadcast %34 : vector<1x20xf32> to vector<2x20xf32>
    %189 = arith.mulf %188, %187 : vector<2x20xf32>
    %190 = arith.addf %186, %189 : vector<2x20xf32>
    %cst_86 = arith.constant dense<0xFF800000> : vector<2xf32>
    %191 = vector.multi_reduction <maximumf>, %190, %cst_86 [1] : vector<2x20xf32> to vector<2xf32>
    %192 = vector.shape_cast %191 : vector<2xf32> to vector<2x1xf32>
    %193 = vector.broadcast %192 : vector<2x1xf32> to vector<2x20xf32>
    %194 = arith.subf %190, %193 : vector<2x20xf32>
    %195 = math.exp %194 : vector<2x20xf32>
    %cst_87 = arith.constant dense<0.000000e+00> : vector<2xf32>
    %196 = vector.multi_reduction <add>, %195, %cst_87 [1] : vector<2x20xf32> to vector<2xf32>
    %197 = vector.shape_cast %196 : vector<2xf32> to vector<2x1xf32>
    %198 = vector.broadcast %197 : vector<2x1xf32> to vector<2x20xf32>
    %199 = arith.divf %195, %198 : vector<2x20xf32>
    %200 = arith.addf %184, %199 : vector<2x20xf32>
    %201 = vector.broadcast %28 : vector<1x20xf32> to vector<2x20xf32>
    %202 = arith.mulf %201, %190 : vector<2x20xf32>
    %203 = vector.extract_strided_slice %166 {offsets = [4, 0], sizes = [2, 20], strides = [1, 1]} : vector<8x20xf32> to vector<2x20xf32>
    %204 = vector.broadcast %34 : vector<1x20xf32> to vector<2x20xf32>
    %205 = arith.mulf %204, %203 : vector<2x20xf32>
    %206 = arith.addf %202, %205 : vector<2x20xf32>
    %cst_88 = arith.constant dense<0xFF800000> : vector<2xf32>
    %207 = vector.multi_reduction <maximumf>, %206, %cst_88 [1] : vector<2x20xf32> to vector<2xf32>
    %208 = vector.shape_cast %207 : vector<2xf32> to vector<2x1xf32>
    %209 = vector.broadcast %208 : vector<2x1xf32> to vector<2x20xf32>
    %210 = arith.subf %206, %209 : vector<2x20xf32>
    %211 = math.exp %210 : vector<2x20xf32>
    %cst_89 = arith.constant dense<0.000000e+00> : vector<2xf32>
    %212 = vector.multi_reduction <add>, %211, %cst_89 [1] : vector<2x20xf32> to vector<2xf32>
    %213 = vector.shape_cast %212 : vector<2xf32> to vector<2x1xf32>
    %214 = vector.broadcast %213 : vector<2x1xf32> to vector<2x20xf32>
    %215 = arith.divf %211, %214 : vector<2x20xf32>
    %216 = arith.addf %200, %215 : vector<2x20xf32>
    %217 = vector.broadcast %28 : vector<1x20xf32> to vector<2x20xf32>
    %218 = arith.mulf %217, %206 : vector<2x20xf32>
    %219 = vector.extract_strided_slice %166 {offsets = [6, 0], sizes = [2, 20], strides = [1, 1]} : vector<8x20xf32> to vector<2x20xf32>
    %220 = vector.broadcast %34 : vector<1x20xf32> to vector<2x20xf32>
    %221 = arith.mulf %220, %219 : vector<2x20xf32>
    %222 = arith.addf %218, %221 : vector<2x20xf32>
    %cst_90 = arith.constant dense<0xFF800000> : vector<2xf32>
    %223 = vector.multi_reduction <maximumf>, %222, %cst_90 [1] : vector<2x20xf32> to vector<2xf32>
    %224 = vector.shape_cast %223 : vector<2xf32> to vector<2x1xf32>
    %225 = vector.broadcast %224 : vector<2x1xf32> to vector<2x20xf32>
    %226 = arith.subf %222, %225 : vector<2x20xf32>
    %227 = math.exp %226 : vector<2x20xf32>
    %cst_91 = arith.constant dense<0.000000e+00> : vector<2xf32>
    %228 = vector.multi_reduction <add>, %227, %cst_91 [1] : vector<2x20xf32> to vector<2xf32>
    %229 = vector.shape_cast %228 : vector<2xf32> to vector<2x1xf32>
    %230 = vector.broadcast %229 : vector<2x1xf32> to vector<2x20xf32>
    %231 = arith.divf %227, %230 : vector<2x20xf32>
    %232 = arith.addf %216, %231 : vector<2x20xf32>
    %c0_92 = arith.constant 0 : index
    %c0_93 = arith.constant 0 : index
    %233 = vector.load %arg22[%c0_92, %c0_93] : memref<2x20xf32, #tpu.memory_space<vmem>>, vector<2x20xf32>
    tpu.vector_store %arg22[%c0_92, %c0_93], %222 {strides = array<i32>} : memref<2x20xf32, #tpu.memory_space<vmem>>, vector<2x20xf32>,
    %c0_94 = arith.constant 0 : index
    %c0_95 = arith.constant 0 : index
    %234 = vector.load %arg24[%c0_94, %c0_95] : memref<2x20xf32, #tpu.memory_space<vmem>>, vector<2x20xf32>
    tpu.vector_store %arg24[%c0_94, %c0_95], %232 {strides = array<i32>} : memref<2x20xf32, #tpu.memory_space<vmem>>, vector<2x20xf32>,
    %c1_i32 = arith.constant 1 : i32
    %235 = arith.cmpi eq, %arg0, %c1_i32 : i32
    %236 = arith.extui %235 : i1 to i32
    %c0_i32_96 = arith.constant 0 : i32
    %237 = arith.cmpi ne, %236, %c0_i32_96 : i32
    scf.if %237 {
      %c0_97 = arith.constant 0 : index
      %c0_98 = arith.constant 0 : index
      %238 = vector.load %arg24[%c0_97, %c0_98] : memref<2x20xf32, #tpu.memory_space<vmem>>, vector<2x20xf32>
      %c0_99 = arith.constant 0 : index
      %c0_100 = arith.constant 0 : index
      %239 = vector.load %arg16[%c0_99, %c0_100] : memref<2x20xf32, #tpu.memory_space<vmem>>, vector<2x20xf32>
      tpu.vector_store %arg16[%c0_99, %c0_100], %238 {strides = array<i32>} : memref<2x20xf32, #tpu.memory_space<vmem>>, vector<2x20xf32>,
      %c0_101 = arith.constant 0 : index
      %c0_102 = arith.constant 0 : index
      %240 = vector.load %arg23[%c0_101, %c0_102] : memref<2x32xf32, #tpu.memory_space<vmem>>, vector<2x32xf32>
      %cst_103 = arith.constant dense<0.000000e+00> : vector<32xf32>
      %241 = vector.multi_reduction <add>, %240, %cst_103 [0] : vector<2x32xf32> to vector<32xf32>
      %242 = vector.shape_cast %241 : vector<32xf32> to vector<1x32xf32>
      %cst_104 = arith.constant 6.250000e-02 : f32
      %243 = vector.broadcast %cst_104 : f32 to vector<1x32xf32>
      %244 = arith.mulf %242, %243 : vector<1x32xf32>
      %c0_105 = arith.constant 0 : index
      %c0_106 = arith.constant 0 : index
      %245 = vector.load %arg17[%c0_105, %c0_106] : memref<1x32xf32, #tpu.memory_space<vmem>>, vector<1x32xf32>
      tpu.vector_store %arg17[%c0_105, %c0_106], %244 {strides = array<i32>} : memref<1x32xf32, #tpu.memory_space<vmem>>, vector<1x32xf32>,
    } else {
    }
    return
  }
  func.func @transform_0(%arg0: i32) -> (i32, i32) {
    %c0_i32 = arith.constant 0 : i32
    %c0_i32_0 = arith.constant 0 : i32
    return %arg0, %c0_i32 : i32, i32
  }
  func.func @transform_1(%arg0: i32) -> (i32, i32) {
    %c0_i32 = arith.constant 0 : i32
    %c0_i32_0 = arith.constant 0 : i32
    %c0_i32_1 = arith.constant 0 : i32
    return %c0_i32, %c0_i32_0 : i32, i32
  }
  func.func @transform_2(%arg0: i32) -> (i32, i32) {
    %c0_i32 = arith.constant 0 : i32
    %c0_i32_0 = arith.constant 0 : i32
    %c0_i32_1 = arith.constant 0 : i32
    return %c0_i32, %c0_i32_0 : i32, i32
  }
  func.func @transform_3(%arg0: i32) -> (i32, i32) {
    %c0_i32 = arith.constant 0 : i32
    %c0_i32_0 = arith.constant 0 : i32
    %c0_i32_1 = arith.constant 0 : i32
    return %c0_i32, %c0_i32_0 : i32, i32
  }
  func.func @transform_4(%arg0: i32) -> (i32, i32) {
    %c0_i32 = arith.constant 0 : i32
    %c0_i32_0 = arith.constant 0 : i32
    %c0_i32_1 = arith.constant 0 : i32
    return %c0_i32, %c0_i32_0 : i32, i32
  }
  func.func @transform_5(%arg0: i32) -> (i32, i32) {
    %c0_i32 = arith.constant 0 : i32
    %c0_i32_0 = arith.constant 0 : i32
    %c0_i32_1 = arith.constant 0 : i32
    return %c0_i32, %c0_i32_0 : i32, i32
  }
  func.func @transform_6(%arg0: i32) -> (i32, i32) {
    %c0_i32 = arith.constant 0 : i32
    %c0_i32_0 = arith.constant 0 : i32
    %c0_i32_1 = arith.constant 0 : i32
    return %c0_i32, %c0_i32_0 : i32, i32
  }
  func.func @transform_7(%arg0: i32) -> (i32, i32) {
    %c0_i32 = arith.constant 0 : i32
    %c0_i32_0 = arith.constant 0 : i32
    %c0_i32_1 = arith.constant 0 : i32
    return %c0_i32, %c0_i32_0 : i32, i32
  }
  func.func @transform_8(%arg0: i32) -> (i32, i32) {
    %c0_i32 = arith.constant 0 : i32
    %c0_i32_0 = arith.constant 0 : i32
    %c0_i32_1 = arith.constant 0 : i32
    return %c0_i32, %c0_i32_0 : i32, i32
  }
  func.func @transform_9(%arg0: i32) -> (i32, i32) {
    %c0_i32 = arith.constant 0 : i32
    %c0_i32_0 = arith.constant 0 : i32
    %c0_i32_1 = arith.constant 0 : i32
    return %c0_i32, %c0_i32_0 : i32, i32
  }
  func.func @transform_10(%arg0: i32) -> (i32, i32) {
    %c0_i32 = arith.constant 0 : i32
    %c0_i32_0 = arith.constant 0 : i32
    %c0_i32_1 = arith.constant 0 : i32
    return %c0_i32, %c0_i32_0 : i32, i32
  }
  func.func @transform_11(%arg0: i32) -> (i32, i32) {
    %c0_i32 = arith.constant 0 : i32
    %c0_i32_0 = arith.constant 0 : i32
    %c0_i32_1 = arith.constant 0 : i32
    return %c0_i32, %c0_i32_0 : i32, i32
  }
  func.func @transform_12(%arg0: i32) -> (i32, i32) {
    %c0_i32 = arith.constant 0 : i32
    %c0_i32_0 = arith.constant 0 : i32
    %c0_i32_1 = arith.constant 0 : i32
    return %c0_i32, %c0_i32_0 : i32, i32
  }
  func.func @transform_13(%arg0: i32) -> (i32, i32) {
    %c0_i32 = arith.constant 0 : i32
    %c0_i32_0 = arith.constant 0 : i32
    %c0_i32_1 = arith.constant 0 : i32
    return %c0_i32, %c0_i32_0 : i32, i32
  }
  func.func @transform_14(%arg0: i32) -> (i32, i32) {
    %c0_i32 = arith.constant 0 : i32
    %c0_i32_0 = arith.constant 0 : i32
    %c0_i32_1 = arith.constant 0 : i32
    return %c0_i32, %c0_i32_0 : i32, i32
  }
  func.func @transform_15(%arg0: i32) -> (i32, i32) {
    %c0_i32 = arith.constant 0 : i32
    %c0_i32_0 = arith.constant 0 : i32
    %c0_i32_1 = arith.constant 0 : i32
    return %c0_i32, %c0_i32_0 : i32, i32
  }
  func.func @transform_16(%arg0: i32) -> (i32, i32) {
    %c0_i32 = arith.constant 0 : i32
    %c0_i32_0 = arith.constant 0 : i32
    %c0_i32_1 = arith.constant 0 : i32
    return %c0_i32, %c0_i32_0 : i32, i32
  }
  func.func @transform_17(%arg0: i32) -> (i32, i32) {
    %c0_i32 = arith.constant 0 : i32
    %c0_i32_0 = arith.constant 0 : i32
    return %arg0, %c0_i32 : i32, i32
  }
}

</mosaic_0001>

<llo_original>
// kernel: snn_forward.3
$region0: #{snn_forward.3}
  #allocation0 [shape = 'u32[]', space=smem, size = 0x4, offset = 0x4, fixed_abs, tag = 'smem constant byte address 0x4 - core index']
  #allocation1 [shape = 'u32[144,128]{1,0:T(1,128)}', space=vmem, size = 0x12000, scoped, tag = 'internal scratch']
  #allocation2 [shape = 'f32[2,32]{1,0:T(2,128)}', space=vmem, size = 0x400, scoped, tag = 'scratch operand']
  #allocation3 [shape = 'f32[2,32]{1,0:T(2,128)}', space=vmem, size = 0x400, scoped, tag = 'scratch operand']
  #allocation4 [shape = 'f32[2,32]{1,0:T(2,128)}', space=vmem, size = 0x400, scoped, tag = 'scratch operand']
  #allocation5 [shape = 'f32[2,20]{1,0:T(2,128)}', space=vmem, size = 0x400, scoped, tag = 'scratch operand']
  #allocation6 [shape = 'f32[2,32]{1,0:T(2,128)}', space=vmem, size = 0x400, scoped, tag = 'scratch operand']
  #allocation7 [shape = 'f32[2,20]{1,0:T(2,128)}', space=vmem, size = 0x400, scoped, tag = 'scratch operand']
  #allocation8 [shape = 'f32[8,32]{1,0:T(8,128)}', space=vmem, size = 0x1000, scoped, tag = 'scratch operand']
  %s0 = inlined_call_operand.vmem [shape: bf16[16,40], index: 0, kind: input, shape index: {}]
  %s1 = inlined_call_operand.vmem [shape: bf16[40,32], index: 1, kind: input, shape index: {}]
  %s2 = inlined_call_operand.vmem [shape: f32[1,32], index: 2, kind: input, shape index: {}]
  %s3 = inlined_call_operand.vmem [shape: bf16[32,32], index: 3, kind: input, shape index: {}]
  %s4 = inlined_call_operand.vmem [shape: f32[1,32], index: 4, kind: input, shape index: {}]
  %s5 = inlined_call_operand.vmem [shape: f32[1,32], index: 5, kind: input, shape index: {}]
  %s6 = inlined_call_operand.vmem [shape: f32[1,32], index: 6, kind: input, shape index: {}]
  %s7 = inlined_call_operand.vmem [shape: f32[1,32], index: 7, kind: input, shape index: {}]
  %s8 = inlined_call_operand.vmem [shape: bf16[32,20], index: 8, kind: input, shape index: {}]
  %s9 = inlined_call_operand.vmem [shape: f32[1,20], index: 9, kind: input, shape index: {}]
  %s10 = inlined_call_operand.vmem [shape: f32[1,20], index: 10, kind: input, shape index: {}]
  %s11 = inlined_call_operand.vmem [shape: f32[2,32], index: 11, kind: input, shape index: {}]
  %s12 = inlined_call_operand.vmem [shape: f32[2,32], index: 12, kind: input, shape index: {}]
  %s13 = inlined_call_operand.vmem [shape: f32[2,32], index: 13, kind: input, shape index: {}]
  %s14 = inlined_call_operand.vmem [shape: f32[2,20], index: 14, kind: input, shape index: {}]
  %s15 = inlined_call_operand.hbm [shape: f32[2,20], index: 15, kind: output, shape index: {0}]
  %s16 = inlined_call_operand.hbm [shape: f32[1,32], index: 16, kind: output, shape index: {1}]
  %s17 = inlined_call_operand.vmem [shape: bf16[16,32], index: 17, kind: output, shape index: {2}]
  %18 = xla_tuple %s15, %s16, %s17
  %s19 = sld [smem:[#allocation0]]
  $region117: #{snn_forward.3} parent=0
    _
  %s21 = ssub.s32 1, %s19
  %s22 = scalar_select 0, %s21, %s19
  $region1: #{snn_forward.3} parent=0
    #allocation9 [shape = 'u8[1024]{0}', space=vmem, size = 0x400, scoped, tag = 'output window, operand 0, single buffered']
    #allocation10 [shape = 's32[2]{0}', space=sflag, size = 0x8, scoped, tag = 'scoped memory for snn_forward.3']
    #allocation11 [shape = 'u8[512]{0}', space=vmem, size = 0x400, scoped, tag = 'output window, operand 1, single buffered']
    #allocation12 [shape = 's32[1]{0}', space=sflag, size = 0x4, scoped, tag = 'scoped memory for snn_forward.3']
    %23 = vsyncpa [#allocation10], 0
    %24 = vsyncpa [#allocation12], 0
    loop: start=0, step=1, limit=4
    $region2: #{snn_forward.3} parent=1 // loop_pre_header
      _
    $region3: #{snn_forward.3} parent=1 // loop_header
      %s26 = sphi 0, %s30
      %p27 = scmp.ge.s32.totalorder %s26, 4
      %s36 = sphi 0, %s38
      %s39 = sphi 0, %s36
      %s40 = sphi 0, %s39
      %s56 = sphi 0, %s40
      %s60 = sphi 0, %s60
      %s62 = sphi 0, %s60
      %s63 = sphi 0, %s62
      %s77 = sphi 0, %s63
      %s81 = sphi 0, %s81
      %s83 = sphi 0, %s81
      %s84 = sphi 0, %s83
      %s98 = sphi 0, %s84
      %s102 = sphi 0, %s102
      %s104 = sphi 0, %s102
      %s105 = sphi 0, %s104
      %s119 = sphi 0, %s105
      %s123 = sphi 0, %s123
      %s125 = sphi 0, %s123
      %s126 = sphi 0, %s125
      %s140 = sphi 0, %s126
      %s144 = sphi 0, %s144
      %s146 = sphi 0, %s144
      %s147 = sphi 0, %s146
      %s161 = sphi 0, %s147
      %s165 = sphi 0, %s165
      %s167 = sphi 0, %s165
      %s168 = sphi 0, %s167
      %s182 = sphi 0, %s168
      %s186 = sphi 0, %s186
      %s188 = sphi 0, %s186
      %s189 = sphi 0, %s188
      %s203 = sphi 0, %s189
      %s207 = sphi 0, %s207
      %s209 = sphi 0, %s207
      %s210 = sphi 0, %s209
      %s224 = sphi 0, %s210
      %s228 = sphi 0, %s228
      %s230 = sphi 0, %s228
      %s231 = sphi 0, %s230
      %s245 = sphi 0, %s231
      %s249 = sphi 0, %s249
      %s251 = sphi 0, %s249
      %s252 = sphi 0, %s251
      %s266 = sphi 0, %s252
      %s270 = sphi 0, %s270
      %s272 = sphi 0, %s270
      %s273 = sphi 0, %s272
      %s287 = sphi 0, %s273
      %s291 = sphi 0, %s291
      %s293 = sphi 0, %s291
      %s294 = sphi 0, %s293
      %s308 = sphi 0, %s294
      %s312 = sphi 0, %s312
      %s314 = sphi 0, %s312
      %s315 = sphi 0, %s314
      %s329 = sphi 0, %s315
      %s333 = sphi 0, %s333
      %s335 = sphi 0, %s333
      %s336 = sphi 0, %s335
      %s350 = sphi 0, %s336
      %s354 = sphi 0, %s354
      %s356 = sphi 0, %s354
      %s357 = sphi 0, %s356
      %s371 = sphi 0, %s357
      %s375 = sphi 0, %s375
      %s377 = sphi 0, %s375
      %s378 = sphi 0, %s377
      %s392 = sphi 0, %s378
      %s398 = sphi 0, %s400
      %s401 = sphi 0, %s398
      %s402 = sphi 0, %s401
      %s418 = sphi 0, %s402
    $region4: #{snn_forward.3} parent=1 // loop_header_branch
      %29 = sbr.rel (%p27) target = $region8
    $region5: #{snn_forward.3} parent=1 // loop_body
      %s31 = ssub.s32 %s26, 1
      %s32 = ssub.s32 %s26, 2
      %s33 = sadd.s32 %s26, 1
      %s34 = ssub.s32 %s26, %s33
      %p35 = scmp.eq.s32.totalorder %s34, 0
      %s37 = sadd.s32 %s36, 1
      %s38 = scalar_select %p35, %s36, %s37
      %p41 = pneg %p35
      %p42 = scmp.eq.s32.totalorder %s26, 1
      %p43 = por %p41, %p42
      %p44 = scmp.ne.s32.totalorder %s36, %s39
      %p45 = scmp.eq.s32.totalorder %s26, 0
      %p46 = por %p44, %p45
      %p47 = scmp.ne.s32.totalorder %s36, %s39
      %p48 = scmp.eq.s32.totalorder %s31, 1
      %p49 = por %p47, %p48
      %p50 = scmp.ne.s32.totalorder %s39, %s40
      %p51 = scmp.eq.s32.totalorder %s31, 0
      %p52 = por %p50, %p51
      %p53 = scmp.ne.s32.totalorder %s39, %s40
      %p54 = scmp.eq.s32.totalorder %s32, 1
      %p55 = por %p53, %p54
      %p57 = scmp.ne.s32.totalorder %s40, %s56
      %p58 = scmp.eq.s32.totalorder %s32, 0
      %p59 = por %p57, %p58
      %s61 = sadd.s32 %s60, 1
      %p64 = scmp.eq.s32.totalorder %s26, 1
      %p65 = scmp.ne.s32.totalorder %s60, %s62
      %p66 = scmp.eq.s32.totalorder %s26, 0
      %p67 = por %p65, %p66
      %p68 = scmp.ne.s32.totalorder %s60, %s62
      %p69 = scmp.eq.s32.totalorder %s31, 1
      %p70 = por %p68, %p69
      %p71 = scmp.ne.s32.totalorder %s62, %s63
      %p72 = scmp.eq.s32.totalorder %s31, 0
      %p73 = por %p71, %p72
      %p74 = scmp.ne.s32.totalorder %s62, %s63
      %p75 = scmp.eq.s32.totalorder %s32, 1
      %p76 = por %p74, %p75
      %p78 = scmp.ne.s32.totalorder %s63, %s77
      %p79 = scmp.eq.s32.totalorder %s32, 0
      %p80 = por %p78, %p79
      %s82 = sadd.s32 %s81, 1
      %p85 = scmp.eq.s32.totalorder %s26, 1
      %p86 = scmp.ne.s32.totalorder %s81, %s83
      %p87 = scmp.eq.s32.totalorder %s26, 0
      %p88 = por %p86, %p87
      %p89 = scmp.ne.s32.totalorder %s81, %s83
      %p90 = scmp.eq.s32.totalorder %s31, 1
      %p91 = por %p89, %p90
      %p92 = scmp.ne.s32.totalorder %s83, %s84
      %p93 = scmp.eq.s32.totalorder %s31, 0
      %p94 = por %p92, %p93
      %p95 = scmp.ne.s32.totalorder %s83, %s84
      %p96 = scmp.eq.s32.totalorder %s32, 1
      %p97 = por %p95, %p96
      %p99 = scmp.ne.s32.totalorder %s84, %s98
      %p100 = scmp.eq.s32.totalorder %s32, 0
      %p101 = por %p99, %p100
      %s103 = sadd.s32 %s102, 1
      %p106 = scmp.eq.s32.totalorder %s26, 1
      %p107 = scmp.ne.s32.totalorder %s102, %s104
      %p108 = scmp.eq.s32.totalorder %s26, 0
      %p109 = por %p107, %p108
      %p110 = scmp.ne.s32.totalorder %s102, %s104
      %p111 = scmp.eq.s32.totalorder %s31, 1
      %p112 = por %p110, %p111
      %p113 = scmp.ne.s32.totalorder %s104, %s105
      %p114 = scmp.eq.s32.totalorder %s31, 0
      %p115 = por %p113, %p114
      %p116 = scmp.ne.s32.totalorder %s104, %s105
      %p117 = scmp.eq.s32.totalorder %s32, 1
      %p118 = por %p116, %p117
      %p120 = scmp.ne.s32.totalorder %s105, %s119
      %p121 = scmp.eq.s32.totalorder %s32, 0
      %p122 = por %p120, %p121
      %s124 = sadd.s32 %s123, 1
      %p127 = scmp.eq.s32.totalorder %s26, 1
      %p128 = scmp.ne.s32.totalorder %s123, %s125
      %p129 = scmp.eq.s32.totalorder %s26, 0
      %p130 = por %p128, %p129
      %p131 = scmp.ne.s32.totalorder %s123, %s125
      %p132 = scmp.eq.s32.totalorder %s31, 1
      %p133 = por %p131, %p132
      %p134 = scmp.ne.s32.totalorder %s125, %s126
      %p135 = scmp.eq.s32.totalorder %s31, 0
      %p136 = por %p134, %p135
      %p137 = scmp.ne.s32.totalorder %s125, %s126
      %p138 = scmp.eq.s32.totalorder %s32, 1
      %p139 = por %p137, %p138
      %p141 = scmp.ne.s32.totalorder %s126, %s140
      %p142 = scmp.eq.s32.totalorder %s32, 0
      %p143 = por %p141, %p142
      %s145 = sadd.s32 %s144, 1
      %p148 = scmp.eq.s32.totalorder %s26, 1
      %p149 = scmp.ne.s32.totalorder %s144, %s146
      %p150 = scmp.eq.s32.totalorder %s26, 0
      %p151 = por %p149, %p150
      %p152 = scmp.ne.s32.totalorder %s144, %s146
      %p153 = scmp.eq.s32.totalorder %s31, 1
      %p154 = por %p152, %p153
      %p155 = scmp.ne.s32.totalorder %s146, %s147
      %p156 = scmp.eq.s32.totalorder %s31, 0
      %p157 = por %p155, %p156
      %p158 = scmp.ne.s32.totalorder %s146, %s147
      %p159 = scmp.eq.s32.totalorder %s32, 1
      %p160 = por %p158, %p159
      %p162 = scmp.ne.s32.totalorder %s147, %s161
      %p163 = scmp.eq.s32.totalorder %s32, 0
      %p164 = por %p162, %p163
      %s166 = sadd.s32 %s165, 1
      %p169 = scmp.eq.s32.totalorder %s26, 1
      %p170 = scmp.ne.s32.totalorder %s165, %s167
      %p171 = scmp.eq.s32.totalorder %s26, 0
      %p172 = por %p170, %p171
      %p173 = scmp.ne.s32.totalorder %s165, %s167
      %p174 = scmp.eq.s32.totalorder %s31, 1
      %p175 = por %p173, %p174
      %p176 = scmp.ne.s32.totalorder %s167, %s168
      %p177 = scmp.eq.s32.totalorder %s31, 0
      %p178 = por %p176, %p177
      %p179 = scmp.ne.s32.totalorder %s167, %s168
      %p180 = scmp.eq.s32.totalorder %s32, 1
      %p181 = por %p179, %p180
      %p183 = scmp.ne.s32.totalorder %s168, %s182
      %p184 = scmp.eq.s32.totalorder %s32, 0
      %p185 = por %p183, %p184
      %s187 = sadd.s32 %s186, 1
      %p190 = scmp.eq.s32.totalorder %s26, 1
      %p191 = scmp.ne.s32.totalorder %s186, %s188
      %p192 = scmp.eq.s32.totalorder %s26, 0
      %p193 = por %p191, %p192
      %p194 = scmp.ne.s32.totalorder %s186, %s188
      %p195 = scmp.eq.s32.totalorder %s31, 1
      %p196 = por %p194, %p195
      %p197 = scmp.ne.s32.totalorder %s188, %s189
      %p198 = scmp.eq.s32.totalorder %s31, 0
      %p199 = por %p197, %p198
      %p200 = scmp.ne.s32.totalorder %s188, %s189
      %p201 = scmp.eq.s32.totalorder %s32, 1
      %p202 = por %p200, %p201
      %p204 = scmp.ne.s32.totalorder %s189, %s203
      %p205 = scmp.eq.s32.totalorder %s32, 0
      %p206 = por %p204, %p205
      %s208 = sadd.s32 %s207, 1
      %p211 = scmp.eq.s32.totalorder %s26, 1
      %p212 = scmp.ne.s32.totalorder %s207, %s209
      %p213 = scmp.eq.s32.totalorder %s26, 0
      %p214 = por %p212, %p213
      %p215 = scmp.ne.s32.totalorder %s207, %s209
      %p216 = scmp.eq.s32.totalorder %s31, 1
      %p217 = por %p215, %p216
      %p218 = scmp.ne.s32.totalorder %s209, %s210
      %p219 = scmp.eq.s32.totalorder %s31, 0
      %p220 = por %p218, %p219
      %p221 = scmp.ne.s32.totalorder %s209, %s210
      %p222 = scmp.eq.s32.totalorder %s32, 1
      %p223 = por %p221, %p222
      %p225 = scmp.ne.s32.totalorder %s210, %s224
      %p226 = scmp.eq.s32.totalorder %s32, 0
      %p227 = por %p225, %p226
      %s229 = sadd.s32 %s228, 1
      %p232 = scmp.eq.s32.totalorder %s26, 1
      %p233 = scmp.ne.s32.totalorder %s228, %s230
      %p234 = scmp.eq.s32.totalorder %s26, 0
      %p235 = por %p233, %p234
      %p236 = scmp.ne.s32.totalorder %s228, %s230
      %p237 = scmp.eq.s32.totalorder %s31, 1
      %p238 = por %p236, %p237
      %p239 = scmp.ne.s32.totalorder %s230, %s231
      %p240 = scmp.eq.s32.totalorder %s31, 0
      %p241 = por %p239, %p240
      %p242 = scmp.ne.s32.totalorder %s230, %s231
      %p243 = scmp.eq.s32.totalorder %s32, 1
      %p244 = por %p242, %p243
      %p246 = scmp.ne.s32.totalorder %s231, %s245
      %p247 = scmp.eq.s32.totalorder %s32, 0
      %p248 = por %p246, %p247
      %s250 = sadd.s32 %s249, 1
      %p253 = scmp.eq.s32.totalorder %s26, 1
      %p254 = scmp.ne.s32.totalorder %s249, %s251
      %p255 = scmp.eq.s32.totalorder %s26, 0
      %p256 = por %p254, %p255
      %p257 = scmp.ne.s32.totalorder %s249, %s251
      %p258 = scmp.eq.s32.totalorder %s31, 1
      %p259 = por %p257, %p258
      %p260 = scmp.ne.s32.totalorder %s251, %s252
      %p261 = scmp.eq.s32.totalorder %s31, 0
      %p262 = por %p260, %p261
      %p263 = scmp.ne.s32.totalorder %s251, %s252
      %p264 = scmp.eq.s32.totalorder %s32, 1
      %p265 = por %p263, %p264
      %p267 = scmp.ne.s32.totalorder %s252, %s266
      %p268 = scmp.eq.s32.totalorder %s32, 0
      %p269 = por %p267, %p268
      %s271 = sadd.s32 %s270, 1
      %p274 = scmp.eq.s32.totalorder %s26, 1
      %p275 = scmp.ne.s32.totalorder %s270, %s272
      %p276 = scmp.eq.s32.totalorder %s26, 0
      %p277 = por %p275, %p276
      %p278 = scmp.ne.s32.totalorder %s270, %s272
      %p279 = scmp.eq.s32.totalorder %s31, 1
      %p280 = por %p278, %p279
      %p281 = scmp.ne.s32.totalorder %s272, %s273
      %p282 = scmp.eq.s32.totalorder %s31, 0
      %p283 = por %p281, %p282
      %p284 = scmp.ne.s32.totalorder %s272, %s273
      %p285 = scmp.eq.s32.totalorder %s32, 1
      %p286 = por %p284, %p285
      %p288 = scmp.ne.s32.totalorder %s273, %s287
      %p289 = scmp.eq.s32.totalorder %s32, 0
      %p290 = por %p288, %p289
      %s292 = sadd.s32 %s291, 1
      %p295 = scmp.eq.s32.totalorder %s26, 1
      %p296 = scmp.ne.s32.totalorder %s291, %s293
      %p297 = scmp.eq.s32.totalorder %s26, 0
      %p298 = por %p296, %p297
      %p299 = scmp.ne.s32.totalorder %s291, %s293
      %p300 = scmp.eq.s32.totalorder %s31, 1
      %p301 = por %p299, %p300
      %p302 = scmp.ne.s32.totalorder %s293, %s294
      %p303 = scmp.eq.s32.totalorder %s31, 0
      %p304 = por %p302, %p303
      %p305 = scmp.ne.s32.totalorder %s293, %s294
      %p306 = scmp.eq.s32.totalorder %s32, 1
      %p307 = por %p305, %p306
      %p309 = scmp.ne.s32.totalorder %s294, %s308
      %p310 = scmp.eq.s32.totalorder %s32, 0
      %p311 = por %p309, %p310
      %s313 = sadd.s32 %s312, 1
      %p316 = scmp.eq.s32.totalorder %s26, 1
      %p317 = scmp.ne.s32.totalorder %s312, %s314
      %p318 = scmp.eq.s32.totalorder %s26, 0
      %p319 = por %p317, %p318
      %p320 = scmp.ne.s32.totalorder %s312, %s314
      %p321 = scmp.eq.s32.totalorder %s31, 1
      %p322 = por %p320, %p321
      %p323 = scmp.ne.s32.totalorder %s314, %s315
      %p324 = scmp.eq.s32.totalorder %s31, 0
      %p325 = por %p323, %p324
      %p326 = scmp.ne.s32.totalorder %s314, %s315
      %p327 = scmp.eq.s32.totalorder %s32, 1
      %p328 = por %p326, %p327
      %p330 = scmp.ne.s32.totalorder %s315, %s329
      %p331 = scmp.eq.s32.totalorder %s32, 0
      %p332 = por %p330, %p331
      %s334 = sadd.s32 %s333, 1
      %p337 = scmp.eq.s32.totalorder %s26, 1
      %p338 = scmp.ne.s32.totalorder %s333, %s335
      %p339 = scmp.eq.s32.totalorder %s26, 0
      %p340 = por %p338, %p339
      %p341 = scmp.ne.s32.totalorder %s333, %s335
      %p342 = scmp.eq.s32.totalorder %s31, 1
      %p343 = por %p341, %p342
      %p344 = scmp.ne.s32.totalorder %s335, %s336
      %p345 = scmp.eq.s32.totalorder %s31, 0
      %p346 = por %p344, %p345
      %p347 = scmp.ne.s32.totalorder %s335, %s336
      %p348 = scmp.eq.s32.totalorder %s32, 1
      %p349 = por %p347, %p348
      %p351 = scmp.ne.s32.totalorder %s336, %s350
      %p352 = scmp.eq.s32.totalorder %s32, 0
      %p353 = por %p351, %p352
      %s355 = sadd.s32 %s354, 1
      %p358 = scmp.eq.s32.totalorder %s26, 1
      %p359 = scmp.ne.s32.totalorder %s354, %s356
      %p360 = scmp.eq.s32.totalorder %s26, 0
      %p361 = por %p359, %p360
      %p362 = scmp.ne.s32.totalorder %s354, %s356
      %p363 = scmp.eq.s32.totalorder %s31, 1
      %p364 = por %p362, %p363
      %p365 = scmp.ne.s32.totalorder %s356, %s357
      %p366 = scmp.eq.s32.totalorder %s31, 0
      %p367 = por %p365, %p366
      %p368 = scmp.ne.s32.totalorder %s356, %s357
      %p369 = scmp.eq.s32.totalorder %s32, 1
      %p370 = por %p368, %p369
      %p372 = scmp.ne.s32.totalorder %s357, %s371
      %p373 = scmp.eq.s32.totalorder %s32, 0
      %p374 = por %p372, %p373
      %s376 = sadd.s32 %s375, 1
      %p379 = scmp.eq.s32.totalorder %s26, 1
      %p380 = scmp.ne.s32.totalorder %s375, %s377
      %p381 = scmp.eq.s32.totalorder %s26, 0
      %p382 = por %p380, %p381
      %p383 = scmp.ne.s32.totalorder %s375, %s377
      %p384 = scmp.eq.s32.totalorder %s31, 1
      %p385 = por %p383, %p384
      %p386 = scmp.ne.s32.totalorder %s377, %s378
      %p387 = scmp.eq.s32.totalorder %s31, 0
      %p388 = por %p386, %p387
      %p389 = scmp.ne.s32.totalorder %s377, %s378
      %p390 = scmp.eq.s32.totalorder %s32, 1
      %p391 = por %p389, %p390
      %p393 = scmp.ne.s32.totalorder %s378, %s392
      %p394 = scmp.eq.s32.totalorder %s32, 0
      %p395 = por %p393, %p394
      %s396 = ssub.s32 %s26, %s33
      %p397 = scmp.eq.s32.totalorder %s396, 0
      %s399 = sadd.s32 %s398, 1
      %s400 = scalar_select %p397, %s398, %s399
      %p403 = pneg %p397
      %p404 = scmp.eq.s32.totalorder %s26, 1
      %p405 = por %p403, %p404
      %p406 = scmp.ne.s32.totalorder %s398, %s401
      %p407 = scmp.eq.s32.totalorder %s26, 0
      %p408 = por %p406, %p407
      %p409 = scmp.ne.s32.totalorder %s398, %s401
      %p410 = scmp.eq.s32.totalorder %s31, 1
      %p411 = por %p409, %p410
      %p412 = scmp.ne.s32.totalorder %s401, %s402
      %p413 = scmp.eq.s32.totalorder %s31, 0
      %p414 = por %p412, %p413
      %p415 = scmp.ne.s32.totalorder %s401, %s402
      %p416 = scmp.eq.s32.totalorder %s32, 1
      %p417 = por %p415, %p416
      %p419 = scmp.ne.s32.totalorder %s402, %s418
      %p420 = scmp.eq.s32.totalorder %s32, 0
      %p421 = por %p419, %p420
      %p422 = scmp.le.s32.totalorder 1, %s26
      %p423 = scmp.lt.s32.totalorder %s26, 3
      %p424 = pnand %p422, %p423
      %p425 = pneg %p424
      // Predicated region
      $region9: #{snn_forward.3} parent=5 // pred_check
        _
      $region10: #{snn_forward.3} parent=5 // pred_check_branch
        %427 = sbr.rel (%p424) target = $region12
      $region11: #{snn_forward.3} parent=5 // pred_region
        %s428 = ssub.s32 %s26, 1
        // Predicated region
        $region13: #{snn_forward.3} parent=11 // pred_check
          %p429 = pneg %p73
        $region14: #{snn_forward.3} parent=11 // pred_check_branch
          %431 = sbr.rel (%p429) target = $region16
        $region15: #{snn_forward.3} parent=11 // pred_region
          _
        $region16: #{snn_forward.3} parent=11 // pred_fallthru
          _
        // Predicated region
        $region17: #{snn_forward.3} parent=11 // pred_check
          %p432 = pneg %p94
        $region18: #{snn_forward.3} parent=11 // pred_check_branch
          %434 = sbr.rel (%p432) target = $region20
        $region19: #{snn_forward.3} parent=11 // pred_region
          _
        $region20: #{snn_forward.3} parent=11 // pred_fallthru
          _
        // Predicated region
        $region21: #{snn_forward.3} parent=11 // pred_check
          %p435 = pneg %p115
        $region22: #{snn_forward.3} parent=11 // pred_check_branch
          %437 = sbr.rel (%p435) target = $region24
        $region23: #{snn_forward.3} parent=11 // pred_region
          _
        $region24: #{snn_forward.3} parent=11 // pred_fallthru
          _
        // Predicated region
        $region25: #{snn_forward.3} parent=11 // pred_check
          %p438 = pneg %p136
        $region26: #{snn_forward.3} parent=11 // pred_check_branch
          %440 = sbr.rel (%p438) target = $region28
        $region27: #{snn_forward.3} parent=11 // pred_region
          _
        $region28: #{snn_forward.3} parent=11 // pred_fallthru
          _
        // Predicated region
        $region29: #{snn_forward.3} parent=11 // pred_check
          %p441 = pneg %p157
        $region30: #{snn_forward.3} parent=11 // pred_check_branch
          %443 = sbr.rel (%p441) target = $region32
        $region31: #{snn_forward.3} parent=11 // pred_region
          _
        $region32: #{snn_forward.3} parent=11 // pred_fallthru
          _
        // Predicated region
        $region33: #{snn_forward.3} parent=11 // pred_check
          %p444 = pneg %p178
        $region34: #{snn_forward.3} parent=11 // pred_check_branch
          %446 = sbr.rel (%p444) target = $region36
        $region35: #{snn_forward.3} parent=11 // pred_region
          _
        $region36: #{snn_forward.3} parent=11 // pred_fallthru
          _
        // Predicated region
        $region37: #{snn_forward.3} parent=11 // pred_check
          %p447 = pneg %p199
        $region38: #{snn_forward.3} parent=11 // pred_check_branch
          %449 = sbr.rel (%p447) target = $region40
        $region39: #{snn_forward.3} parent=11 // pred_region
          _
        $region40: #{snn_forward.3} parent=11 // pred_fallthru
          _
        // Predicated region
        $region41: #{snn_forward.3} parent=11 // pred_check
          %p450 = pneg %p220
        $region42: #{snn_forward.3} parent=11 // pred_check_branch
          %452 = sbr.rel (%p450) target = $region44
        $region43: #{snn_forward.3} parent=11 // pred_region
          _
        $region44: #{snn_forward.3} parent=11 // pred_fallthru
          _
        // Predicated region
        $region45: #{snn_forward.3} parent=11 // pred_check
          %p453 = pneg %p241
        $region46: #{snn_forward.3} parent=11 // pred_check_branch
          %455 = sbr.rel (%p453) target = $region48
        $region47: #{snn_forward.3} parent=11 // pred_region
          _
        $region48: #{snn_forward.3} parent=11 // pred_fallthru
          _
        // Predicated region
        $region49: #{snn_forward.3} parent=11 // pred_check
          %p456 = pneg %p262
        $region50: #{snn_forward.3} parent=11 // pred_check_branch
          %458 = sbr.rel (%p456) target = $region52
        $region51: #{snn_forward.3} parent=11 // pred_region
          _
        $region52: #{snn_forward.3} parent=11 // pred_fallthru
          _
        // Predicated region
        $region53: #{snn_forward.3} parent=11 // pred_check
          %p459 = pneg %p283
        $region54: #{snn_forward.3} parent=11 // pred_check_branch
          %461 = sbr.rel (%p459) target = $region56
        $region55: #{snn_forward.3} parent=11 // pred_region
          _
        $region56: #{snn_forward.3} parent=11 // pred_fallthru
          _
        // Predicated region
        $region57: #{snn_forward.3} parent=11 // pred_check
          %p462 = pneg %p304
        $region58: #{snn_forward.3} parent=11 // pred_check_branch
          %464 = sbr.rel (%p462) target = $region60
        $region59: #{snn_forward.3} parent=11 // pred_region
          _
        $region60: #{snn_forward.3} parent=11 // pred_fallthru
          _
        // Predicated region
        $region61: #{snn_forward.3} parent=11 // pred_check
          %p465 = pneg %p325
        $region62: #{snn_forward.3} parent=11 // pred_check_branch
          %467 = sbr.rel (%p465) target = $region64
        $region63: #{snn_forward.3} parent=11 // pred_region
          _
        $region64: #{snn_forward.3} parent=11 // pred_fallthru
          _
        // Predicated region
        $region65: #{snn_forward.3} parent=11 // pred_check
          %p468 = pneg %p346
        $region66: #{snn_forward.3} parent=11 // pred_check_branch
          %470 = sbr.rel (%p468) target = $region68
        $region67: #{snn_forward.3} parent=11 // pred_region
          _
        $region68: #{snn_forward.3} parent=11 // pred_fallthru
          _
      $region12: #{snn_forward.3} parent=5 // pred_fallthru
        _
      %p471 = scmp.lt.s32.totalorder %s26, 2
      // Predicated region
      $region69: #{snn_forward.3} parent=5 // pred_check
        %p472 = pneg %p471
      $region70: #{snn_forward.3} parent=5 // pred_check_branch
        %474 = sbr.rel (%p472) target = $region72
      $region71: #{snn_forward.3} parent=5 // pred_region
        // Predicated region
        $region73: #{snn_forward.3} parent=71 // pred_check
          %p475 = pneg %p46
        $region74: #{snn_forward.3} parent=71 // pred_check_branch
          %477 = sbr.rel (%p475) target = $region76
        $region75: #{snn_forward.3} parent=71 // pred_region
          %p478 = scmp.lt.s32.totalorder %s26, 1
          %s479 = scalar_select %p478, %s26, 1
          %s480 = smul.addr %s479, 4
          %s481 = scalar_lea.vmem %s0, %s480
        $region76: #{snn_forward.3} parent=71 // pred_fallthru
          _
      $region72: #{snn_forward.3} parent=5 // pred_fallthru
        _
      %p482 = scmp.le.s32.totalorder 1, %s26
      %p483 = scmp.lt.s32.totalorder %s26, 3
      %p484 = pnand %p482, %p483
      %p485 = pneg %p484
      // Predicated region
      $region77: #{snn_forward.3} parent=5 // pred_check
        _
      $region78: #{snn_forward.3} parent=5 // pred_check_branch
        %487 = sbr.rel (%p484) target = $region80
      $region79: #{snn_forward.3} parent=5 // pred_region
        %s488 = ssub.s32 %s26, 1
        %p489 = scmp.lt.s32.totalorder %s31, 1
        %s490 = scalar_select %p489, %s31, 1
        %s491 = smul.addr %s490, 4
        %s492 = scalar_lea.vmem %s0, %s491
        %p493 = pneg %p52
        %p494 = pneg %p49
        %p495 = pneg %p73
        %p496 = pneg %p70
        %p497 = pneg %p94
        %p498 = pneg %p91
        %p499 = pneg %p115
        %p500 = pneg %p112
        %p501 = pneg %p136
        %p502 = pneg %p133
        %p503 = pneg %p157
        %p504 = pneg %p154
        %p505 = pneg %p178
        %p506 = pneg %p175
        %p507 = pneg %p199
        %p508 = pneg %p196
        %p509 = pneg %p220
        %p510 = pneg %p217
        %p511 = pneg %p241
        %p512 = pneg %p238
        %p513 = pneg %p262
        %p514 = pneg %p259
        %p515 = pneg %p283
        %p516 = pneg %p280
        %p517 = pneg %p304
        %p518 = pneg %p301
        %p519 = pneg %p325
        %p520 = pneg %p322
        %p521 = pneg %p346
        %p522 = pneg %p343
        %p523 = pneg %p367
        %p524 = pneg %p364
        %p525 = pneg %p388
        %p526 = pneg %p385
        %p527 = pneg %p414
        %p528 = pneg %p411
        %p529 = scmp.lt.s32.totalorder %s31, 1
        %s530 = scalar_select %p529, %s31, 1
        %s531 = smul.addr %s530, 4
        %s532 = scalar_lea.vmem %s17, %s531
        %p533 = scmp.lt.s32.totalorder %s31, 1
        %s534 = scalar_select %p533, %s31, 1
        %s535 = smul.addr %s534, 4
        %s536 = scalar_lea.vmem %s0, %s535
        %p537 = scmp.lt.s32.totalorder %s31, 1
        %s538 = scalar_select %p537, %s31, 1
        %s539 = smul.addr %s538, 4
        %s540 = scalar_lea.vmem %s17, %s539
        %p542 = scmp.eq.s32.totalorder %s31, 0
        // Predicated region
        $region81: #{snn_forward.3} parent=79 // pred_check
          %p543 = pneg %p542
        $region82: #{snn_forward.3} parent=79 // pred_check_branch
          %545 = sbr.rel (%p543) target = $region84
        $region83: #{snn_forward.3} parent=79 // pred_region
          %v546 = vld [vmem:[%s11] sm:$0x3]
          %vm547 = vcmask 254976
          %548 = vst.msk [vmem:[#allocation2] sm:$0x3] %vm547, %v546
          %v549 = vld [vmem:[%s12] sm:$0x3]
          %550 = vst.msk [vmem:[#allocation3] sm:$0x3] %vm547, %v549
          %v551 = vld [vmem:[%s13] sm:$0x3]
          %552 = vst.msk [vmem:[#allocation4] sm:$0x3] %vm547, %v551
          %v553 = vld [vmem:[%s14] sm:$0x3]
          %vm554 = vcmask 156672
          %555 = vst.msk [vmem:[#allocation5] sm:$0x3] %vm554, %v553
          %556 = vst.msk [vmem:[#allocation6] sm:$0x3] %vm547, 0.0
          %557 = vst.msk [vmem:[#allocation7] sm:$0x3] %vm554, 0.0
        $region84: #{snn_forward.3} parent=79 // pred_fallthru
          _
        %v558 = vld [vmem:[%s4] sm:$0x1]
        %v559 = vmax.f32 %v558, 0.8187308
        %v560 = vmin.f32 %v559, 0.96078944
        %v561 = vld [vmem:[%s5] sm:$0x1]
        %v562 = vmax.f32 %v561, 0.9672161
        %v563 = vmin.f32 %v562, 0.9917013
        %v564 = vld [vmem:[%s6] sm:$0x1]
        %v565 = vmax.f32 %v564, -1.0
        %v566 = vmin.f32 %v565, 1.0
        %v567 = vld [vmem:[%s7] sm:$0x1]
        %v568 = vmax.f32 %v567, 0.0
        %v569 = vmin.f32 %v568, 2.0
        %v570 = vsub.f32 1.0, %v560
        %v571 = vld [vmem:[%s3] sm:$0xf]
        %v572 = vld [vmem:[%s3 + $0x4] sm:$0xf]
        %v573 = vld [vmem:[%s3 + $0x8] sm:$0xf]
        %v574 = vld [vmem:[%s3 + $0xc] sm:$0xf]
        %v575 = vld [vmem:[%s8] sm:$0xf]
        %v576 = vld [vmem:[%s8 + $0x4] sm:$0xf]
        %v577 = vld [vmem:[%s8 + $0x8] sm:$0xf]
        %v578 = vld [vmem:[%s8 + $0xc] sm:$0xf]
        %v579 = vld [vmem:[%s9] sm:$0x1]
        %v580 = vld [vmem:[%s10] sm:$0x1]
        %v581 = vmax.f32 %v580, 0.8187308
        %v582 = vmin.f32 %v581, 0.96078944
        %v583 = vsub.f32 1.0, %v582
        %v584 = vld [vmem:[%s536] sm:$0xf]
        %v585 = vld [vmem:[%s1] sm:$0xf]
        %v586 = vld [vmem:[%s1 + $0x4] sm:$0xf]
        %v587 = vld [vmem:[%s1 + $0x8] sm:$0xf]
        %v588 = vld [vmem:[%s1 + $0xc] sm:$0xf]
        %v589 = vld [vmem:[%s1 + $0x10] sm:$0xf]
        %v590 = vld [vmem:[%s2] sm:$0x1]
        %v592 = vlaneseq
        %v593 = vshrl.u32 %v592, 7
        %v594 = vsub.s32 0, %v593
        %v595 = vrot.slane %v590, %v594
        %v602 = vunpack.c.l.b16 %v585
        %v603 = vunpack.c.l.b16 %v586
        %v604 = vunpack.c.l.b16 %v587
        %v605 = vunpack.c.l.b16 %v588
        %v606 = vunpack.c.l.b16 %v589
        %v607 = vpack.c.b16 %v603, %v602
        %v608 = vpack.c.b16 %v605, %v604
        %v609 = vpack.c.b16 %v606, %v606
        %vm612 = vcmask 326656
        %v614 = vsel %vm612, %v584, 0
        %vm616 = vcmask 1043456
        %v618 = vsel %vm616, %v609, 0
        %620 = vmatprep.subr.bf16.mxu0 0
        %621 = vmatpush1.bf16.msra.mxu0 %v607
        %622 = vmatprep.subr.bf16.mxu0 0
        %623 = vmatpush1.bf16.msra.mxu0 %v608
        %624 = vmatprep.subr.bf16.mxu0 0
        %625 = vmatpush1.bf16.msra.mxu0 %v618
        %626 = vmatprep.subr.bf16.mxu0 0
        %627 = vmatpush1.bf16.msra.mxu0 0
        %628 = vmatprep.subr.bf16.mxu0 0
        %629 = vmatpush1.bf16.msra.mxu0 0
        %630 = vmatprep.subr.bf16.mxu0 0
        %631 = vmatpush1.bf16.msra.mxu0 0
        %632 = vmatprep.subr.bf16.mxu0 0
        %633 = vmatpush1.bf16.msra.mxu0 0
        %634 = vmatprep.subr.bf16.mxu0 0
        %635 = vmatpush1.bf16.msra.mxu0 0
        %636 = vmatprep.subr.bf16.mxu0 0
        %637 = vmatpush1.bf16.msra.mxu0 0
        %638 = vmatprep.subr.bf16.mxu0 0
        %639 = vmatpush1.bf16.msra.mxu0 0
        %640 = vmatprep.subr.bf16.mxu0 0
        %641 = vmatpush1.bf16.msra.mxu0 0
        %642 = vmatprep.subr.bf16.mxu0 0
        %643 = vmatpush1.bf16.msra.mxu0 0
        %644 = vmatprep.subr.bf16.mxu0 0
        %645 = vmatpush1.bf16.msra.mxu0 0
        %646 = vmatprep.subr.bf16.mxu0 0
        %647 = vmatpush1.bf16.msra.mxu0 0
        %648 = vmatprep.subr.bf16.mxu0 0
        %649 = vmatpush1.bf16.msra.mxu0 0
        %650 = vmatprep.subr.bf16.mxu0 0
        %651 = vmatpush1.bf16.msra.mxu0 0
        %652 = vmatprep.mubr.bf16.mxu0 0
        %653 = vmatmul.mubr.bf16.gmra.mrb[0].mxu0 %v614
        %v654 = vpop.f32.mrb[0].mxu0
        %v655 = vadd.f32 %v595, %v654
        %v656 = vpop.f32.mrb[0].mxu0
        %v657 = vpop.f32.mrb[0].mxu0
        %v658 = vpop.f32.mrb[0].mxu0
        %659 = vdwg.mxu0
        %v660 = vld [vmem:[#allocation2] sm:$0x3]
        %v661 = vld [vmem:[#allocation3] sm:$0x3]
        %v662 = vld [vmem:[#allocation4] sm:$0x3]
        %v663 = vld [vmem:[#allocation6] sm:$0x3]
        %v665 = vlaneseq
        %v666 = vshrl.u32 %v665, 7
        %v667 = vsub.s32 0, %v666
        %v668 = vrot.slane %v563, %v667
        %v670 = vmul.f32 %v668, %v661
        %v672 = vlaneseq
        %v673 = vshrl.u32 %v672, 7
        %v674 = vsub.s32 0, %v673
        %v675 = vrot.slane %v566, %v674
        %v677 = vmul.f32 %v675, %v660
        %v678 = vadd.f32 %v670, %v677
        %v680 = vlaneseq
        %v681 = vshrl.u32 %v680, 7
        %v682 = vsub.s32 0, %v681
        %v683 = vrot.slane %v569, %v682
        %v685 = vmul.f32 %v683, %v662
        %v686 = vadd.f32 %v678, %v685
        %v687 = vpack.c.bf16 %v662, %v662
        %v692 = vunpack.c.l.b16 %v571
        %v693 = vunpack.c.l.b16 %v572
        %v694 = vunpack.c.l.b16 %v573
        %v695 = vunpack.c.l.b16 %v574
        %v696 = vpack.c.b16 %v693, %v692
        %v697 = vpack.c.b16 %v695, %v694
        %vm700 = vcmask 261120
        %v702 = vsel %vm700, %v687, 0
        %704 = vmatprep.subr.bf16.mxu0 0
        %705 = vmatpush1.bf16.msra.mxu0 %v696
        %706 = vmatprep.subr.bf16.mxu0 0
        %707 = vmatpush1.bf16.msra.mxu0 %v697
        %708 = vmatprep.subr.bf16.mxu0 0
        %709 = vmatpush1.bf16.msra.mxu0 0
        %710 = vmatprep.subr.bf16.mxu0 0
        %711 = vmatpush1.bf16.msra.mxu0 0
        %712 = vmatprep.subr.bf16.mxu0 0
        %713 = vmatpush1.bf16.msra.mxu0 0
        %714 = vmatprep.subr.bf16.mxu0 0
        %715 = vmatpush1.bf16.msra.mxu0 0
        %716 = vmatprep.subr.bf16.mxu0 0
        %717 = vmatpush1.bf16.msra.mxu0 0
        %718 = vmatprep.subr.bf16.mxu0 0
        %719 = vmatpush1.bf16.msra.mxu0 0
        %720 = vmatprep.subr.bf16.mxu0 0
        %721 = vmatpush1.bf16.msra.mxu0 0
        %722 = vmatprep.subr.bf16.mxu0 0
        %723 = vmatpush1.bf16.msra.mxu0 0
        %724 = vmatprep.subr.bf16.mxu0 0
        %725 = vmatpush1.bf16.msra.mxu0 0
        %726 = vmatprep.subr.bf16.mxu0 0
        %727 = vmatpush1.bf16.msra.mxu0 0
        %728 = vmatprep.subr.bf16.mxu0 0
        %729 = vmatpush1.bf16.msra.mxu0 0
        %730 = vmatprep.subr.bf16.mxu0 0
        %731 = vmatpush1.bf16.msra.mxu0 0
        %732 = vmatprep.subr.bf16.mxu0 0
        %733 = vmatpush1.bf16.msra.mxu0 0
        %734 = vmatprep.subr.bf16.mxu0 0
        %735 = vmatpush1.bf16.msra.mxu0 0
        %736 = vmatprep.mubr.bf16.mxu0 0
        %737 = vmatmul.mubr.bf16.gmra.mrb[0].mxu0 %v702
        %v738 = vpop.f32.mrb[0].mxu0
        %v739 = vadd.f32 0.0, %v738
        %v740 = vpop.f32.mrb[0].mxu0
        %v741 = vpop.f32.mrb[0].mxu0
        %v742 = vpop.f32.mrb[0].mxu0
        %743 = vdwg.mxu0
        %v744 = vsub.f32 %v660, %v662
        %v746 = vlaneseq
        %v747 = vshrl.u32 %v746, 7
        %v748 = vsub.s32 0, %v747
        %v749 = vrot.slane %v560, %v748
        %v751 = vmul.f32 %v749, %v744
        %v752 = vadd.f32 %v655, %v739
        %v753 = vsub.f32 %v752, %v686
        %v755 = vlaneseq
        %v756 = vshrl.u32 %v755, 7
        %v757 = vsub.s32 0, %v756
        %v758 = vrot.slane %v570, %v757
        %v760 = vmul.f32 %v758, %v753
        %v761 = vadd.f32 %v751, %v760
        %v762 = vsub.f32 %v761, 1.0
        %vm763 = vcmp.gt.f32.partialorder %v762, 0.0
        %v764 = vsel %vm763, 1.0, 0.0
        %vm765 = vcmask 254976
        %766 = vst.msk [vmem:[#allocation8] sm:$0x3] %vm765, %v764
        %v767 = vadd.f32 %v663, %v764
        %v768 = vmul.f32 %v668, %v686
        %v769 = vmul.f32 %v675, %v761
        %v770 = vadd.f32 %v768, %v769
        %v771 = vmul.f32 %v683, %v764
        %v772 = vadd.f32 %v770, %v771
        %v773 = vpack.c.bf16 %v764, %v764
        %v775 = vsel %vm700, %v773, 0
        %777 = vmatprep.subr.bf16.mxu0 0
        %778 = vmatpush1.bf16.msra.mxu0 %v696
        %779 = vmatprep.subr.bf16.mxu0 0
        %780 = vmatpush1.bf16.msra.mxu0 %v697
        %781 = vmatprep.subr.bf16.mxu0 0
        %782 = vmatpush1.bf16.msra.mxu0 0
        %783 = vmatprep.subr.bf16.mxu0 0
        %784 = vmatpush1.bf16.msra.mxu0 0
        %785 = vmatprep.subr.bf16.mxu0 0
        %786 = vmatpush1.bf16.msra.mxu0 0
        %787 = vmatprep.subr.bf16.mxu0 0
        %788 = vmatpush1.bf16.msra.mxu0 0
        %789 = vmatprep.subr.bf16.mxu0 0
        %790 = vmatpush1.bf16.msra.mxu0 0
        %791 = vmatprep.subr.bf16.mxu0 0
        %792 = vmatpush1.bf16.msra.mxu0 0
        %793 = vmatprep.subr.bf16.mxu0 0
        %794 = vmatpush1.bf16.msra.mxu0 0
        %795 = vmatprep.subr.bf16.mxu0 0
        %796 = vmatpush1.bf16.msra.mxu0 0
        %797 = vmatprep.subr.bf16.mxu0 0
        %798 = vmatpush1.bf16.msra.mxu0 0
        %799 = vmatprep.subr.bf16.mxu0 0
        %800 = vmatpush1.bf16.msra.mxu0 0
        %801 = vmatprep.subr.bf16.mxu0 0
        %802 = vmatpush1.bf16.msra.mxu0 0
        %803 = vmatprep.subr.bf16.mxu0 0
        %804 = vmatpush1.bf16.msra.mxu0 0
        %805 = vmatprep.subr.bf16.mxu0 0
        %806 = vmatpush1.bf16.msra.mxu0 0
        %807 = vmatprep.subr.bf16.mxu0 0
        %808 = vmatpush1.bf16.msra.mxu0 0
        %809 = vmatprep.mubr.bf16.mxu0 0
        %810 = vmatmul.mubr.bf16.gmra.mrb[0].mxu0 %v775
        %v811 = vpop.f32.mrb[0].mxu0
        %v812 = vadd.f32 0.0, %v811
        %v813 = vpop.f32.mrb[0].mxu0
        %v814 = vpop.f32.mrb[0].mxu0
        %v815 = vpop.f32.mrb[0].mxu0
        %816 = vdwg.mxu0
        %v817 = vsub.f32 %v761, %v764
        %v818 = vmul.f32 %v749, %v817
        %v820 = vrot.slane %v812, 6
        %v822 = vadd.f32 %v655, %v820
        %v824 = vrot.slane %v772, 6
        %v826 = vsub.f32 %v822, %v824
        %v827 = vmul.f32 %v758, %v826
        %v829 = vrot.slane %v827, 2
        %v831 = vadd.f32 %v818, %v829
        %v832 = vsub.f32 %v831, 1.0
        %vm833 = vcmp.gt.f32.partialorder %v832, 0.0
        %v834 = vsel %vm833, 1.0, 0.0
        %835 = vst.msk [vmem:[#allocation8 + $0x2] sm:$0x3] %vm765, %v834
        %v836 = vadd.f32 %v767, %v834
        %v837 = vmul.f32 %v668, %v772
        %v838 = vmul.f32 %v675, %v831
        %v839 = vadd.f32 %v837, %v838
        %v840 = vmul.f32 %v683, %v834
        %v841 = vadd.f32 %v839, %v840
        %v842 = vpack.c.bf16 %v834, %v834
        %v844 = vsel %vm700, %v842, 0
        %846 = vmatprep.subr.bf16.mxu0 0
        %847 = vmatpush1.bf16.msra.mxu0 %v696
        %848 = vmatprep.subr.bf16.mxu0 0
        %849 = vmatpush1.bf16.msra.mxu0 %v697
        %850 = vmatprep.subr.bf16.mxu0 0
        %851 = vmatpush1.bf16.msra.mxu0 0
        %852 = vmatprep.subr.bf16.mxu0 0
        %853 = vmatpush1.bf16.msra.mxu0 0
        %854 = vmatprep.subr.bf16.mxu0 0
        %855 = vmatpush1.bf16.msra.mxu0 0
        %856 = vmatprep.subr.bf16.mxu0 0
        %857 = vmatpush1.bf16.msra.mxu0 0
        %858 = vmatprep.subr.bf16.mxu0 0
        %859 = vmatpush1.bf16.msra.mxu0 0
        %860 = vmatprep.subr.bf16.mxu0 0
        %861 = vmatpush1.bf16.msra.mxu0 0
        %862 = vmatprep.subr.bf16.mxu0 0
        %863 = vmatpush1.bf16.msra.mxu0 0
        %864 = vmatprep.subr.bf16.mxu0 0
        %865 = vmatpush1.bf16.msra.mxu0 0
        %866 = vmatprep.subr.bf16.mxu0 0
        %867 = vmatpush1.bf16.msra.mxu0 0
        %868 = vmatprep.subr.bf16.mxu0 0
        %869 = vmatpush1.bf16.msra.mxu0 0
        %870 = vmatprep.subr.bf16.mxu0 0
        %871 = vmatpush1.bf16.msra.mxu0 0
        %872 = vmatprep.subr.bf16.mxu0 0
        %873 = vmatpush1.bf16.msra.mxu0 0
        %874 = vmatprep.subr.bf16.mxu0 0
        %875 = vmatpush1.bf16.msra.mxu0 0
        %876 = vmatprep.subr.bf16.mxu0 0
        %877 = vmatpush1.bf16.msra.mxu0 0
        %878 = vmatprep.mubr.bf16.mxu0 0
        %879 = vmatmul.mubr.bf16.gmra.mrb[0].mxu0 %v844
        %v880 = vpop.f32.mrb[0].mxu0
        %v881 = vadd.f32 0.0, %v880
        %v882 = vpop.f32.mrb[0].mxu0
        %v883 = vpop.f32.mrb[0].mxu0
        %v884 = vpop.f32.mrb[0].mxu0
        %885 = vdwg.mxu0
        %v886 = vsub.f32 %v831, %v834
        %v887 = vmul.f32 %v749, %v886
        %v889 = vrot.slane %v881, 4
        %v891 = vadd.f32 %v655, %v889
        %v893 = vrot.slane %v841, 4
        %v895 = vsub.f32 %v891, %v893
        %v896 = vmul.f32 %v758, %v895
        %v898 = vrot.slane %v896, 4
        %v900 = vadd.f32 %v887, %v898
        %v901 = vsub.f32 %v900, 1.0
        %vm902 = vcmp.gt.f32.partialorder %v901, 0.0
        %v903 = vsel %vm902, 1.0, 0.0
        %904 = vst.msk [vmem:[#allocation8 + $0x4] sm:$0x3] %vm765, %v903
        %v905 = vadd.f32 %v836, %v903
        %v906 = vmul.f32 %v668, %v841
        %v907 = vmul.f32 %v675, %v900
        %v908 = vadd.f32 %v906, %v907
        %v909 = vmul.f32 %v683, %v903
        %v910 = vadd.f32 %v908, %v909
        %v911 = vpack.c.bf16 %v903, %v903
        %v913 = vsel %vm700, %v911, 0
        %915 = vmatprep.subr.bf16.mxu0 0
        %916 = vmatpush1.bf16.msra.mxu0 %v696
        %917 = vmatprep.subr.bf16.mxu0 0
        %918 = vmatpush1.bf16.msra.mxu0 %v697
        %919 = vmatprep.subr.bf16.mxu0 0
        %920 = vmatpush1.bf16.msra.mxu0 0
        %921 = vmatprep.subr.bf16.mxu0 0
        %922 = vmatpush1.bf16.msra.mxu0 0
        %923 = vmatprep.subr.bf16.mxu0 0
        %924 = vmatpush1.bf16.msra.mxu0 0
        %925 = vmatprep.subr.bf16.mxu0 0
        %926 = vmatpush1.bf16.msra.mxu0 0
        %927 = vmatprep.subr.bf16.mxu0 0
        %928 = vmatpush1.bf16.msra.mxu0 0
        %929 = vmatprep.subr.bf16.mxu0 0
        %930 = vmatpush1.bf16.msra.mxu0 0
        %931 = vmatprep.subr.bf16.mxu0 0
        %932 = vmatpush1.bf16.msra.mxu0 0
        %933 = vmatprep.subr.bf16.mxu0 0
        %934 = vmatpush1.bf16.msra.mxu0 0
        %935 = vmatprep.subr.bf16.mxu0 0
        %936 = vmatpush1.bf16.msra.mxu0 0
        %937 = vmatprep.subr.bf16.mxu0 0
        %938 = vmatpush1.bf16.msra.mxu0 0
        %939 = vmatprep.subr.bf16.mxu0 0
        %940 = vmatpush1.bf16.msra.mxu0 0
        %941 = vmatprep.subr.bf16.mxu0 0
        %942 = vmatpush1.bf16.msra.mxu0 0
        %943 = vmatprep.subr.bf16.mxu0 0
        %944 = vmatpush1.bf16.msra.mxu0 0
        %945 = vmatprep.subr.bf16.mxu0 0
        %946 = vmatpush1.bf16.msra.mxu0 0
        %947 = vmatprep.mubr.bf16.mxu0 0
        %948 = vmatmul.mubr.bf16.gmra.mrb[0].mxu0 %v913
        %v949 = vpop.f32.mrb[0].mxu0
        %v950 = vadd.f32 0.0, %v949
        %v951 = vpop.f32.mrb[0].mxu0
        %v952 = vpop.f32.mrb[0].mxu0
        %v953 = vpop.f32.mrb[0].mxu0
        %954 = vdwg.mxu0
        %v955 = vsub.f32 %v900, %v903
        %v956 = vmul.f32 %v749, %v955
        %v958 = vrot.slane %v950, 2
        %v960 = vadd.f32 %v655, %v958
        %v962 = vrot.slane %v910, 2
        %v964 = vsub.f32 %v960, %v962
        %v965 = vmul.f32 %v758, %v964
        %v967 = vrot.slane %v965, 6
        %v969 = vadd.f32 %v956, %v967
        %v970 = vsub.f32 %v969, 1.0
        %vm971 = vcmp.gt.f32.partialorder %v970, 0.0
        %v972 = vsel %vm971, 1.0, 0.0
        %973 = vst.msk [vmem:[#allocation8 + $0x6] sm:$0x3] %vm765, %v972
        %v974 = vadd.f32 %v905, %v972
        %975 = vst.msk [vmem:[#allocation2] sm:$0x3] %vm765, %v969
        %976 = vst.msk [vmem:[#allocation3] sm:$0x3] %vm765, %v910
        %977 = vst.msk [vmem:[#allocation4] sm:$0x3] %vm765, %v972
        %978 = vst.msk [vmem:[#allocation6] sm:$0x3] %vm765, %v974
        %v979 = vld [vmem:[#allocation8] sm:$0xff]
        %v980 = vpack.c.bf16 %v979, %v979
        %vm981 = vcmask 257024
        %982 = vst.msk [vmem:[%s540] sm:$0xf] %vm981, %v980
        %v984 = vlaneseq
        %v985 = vshrl.u32 %v984, 7
        %v986 = vsub.s32 0, %v985
        %v987 = vrot.slane %v579, %v986
        %v993 = vunpack.c.l.b16 %v575
        %v994 = vunpack.c.l.b16 %v576
        %v995 = vunpack.c.l.b16 %v577
        %v996 = vunpack.c.l.b16 %v578
        %v997 = vpack.c.b16 %v994, %v993
        %v998 = vpack.c.b16 %v996, %v995
        %v1002 = vsel %vm700, %v980, 0
        %1004 = vmatprep.subr.bf16.mxu0 0
        %1005 = vmatpush1.bf16.msra.mxu0 %v997
        %1006 = vmatprep.subr.bf16.mxu0 0
        %1007 = vmatpush1.bf16.msra.mxu0 %v998
        %1008 = vmatprep.subr.bf16.mxu0 0
        %1009 = vmatpush1.bf16.msra.mxu0 0
        %1010 = vmatprep.subr.bf16.mxu0 0
        %1011 = vmatpush1.bf16.msra.mxu0 0
        %1012 = vmatprep.subr.bf16.mxu0 0
        %1013 = vmatpush1.bf16.msra.mxu0 0
        %1014 = vmatprep.subr.bf16.mxu0 0
        %1015 = vmatpush1.bf16.msra.mxu0 0
        %1016 = vmatprep.subr.bf16.mxu0 0
        %1017 = vmatpush1.bf16.msra.mxu0 0
        %1018 = vmatprep.subr.bf16.mxu0 0
        %1019 = vmatpush1.bf16.msra.mxu0 0
        %1020 = vmatprep.subr.bf16.mxu0 0
        %1021 = vmatpush1.bf16.msra.mxu0 0
        %1022 = vmatprep.subr.bf16.mxu0 0
        %1023 = vmatpush1.bf16.msra.mxu0 0
        %1024 = vmatprep.subr.bf16.mxu0 0
        %1025 = vmatpush1.bf16.msra.mxu0 0
        %1026 = vmatprep.subr.bf16.mxu0 0
        %1027 = vmatpush1.bf16.msra.mxu0 0
        %1028 = vmatprep.subr.bf16.mxu0 0
        %1029 = vmatpush1.bf16.msra.mxu0 0
        %1030 = vmatprep.subr.bf16.mxu0 0
        %1031 = vmatpush1.bf16.msra.mxu0 0
        %1032 = vmatprep.subr.bf16.mxu0 0
        %1033 = vmatpush1.bf16.msra.mxu0 0
        %1034 = vmatprep.subr.bf16.mxu0 0
        %1035 = vmatpush1.bf16.msra.mxu0 0
        %1036 = vmatprep.mubr.bf16.mxu0 0
        %1037 = vmatmul.mubr.bf16.gmra.mrb[0].mxu0 %v1002
        %v1038 = vpop.f32.mrb[0].mxu0
        %v1039 = vadd.f32 %v987, %v1038
        %v1040 = vpop.f32.mrb[0].mxu0
        %v1041 = vpop.f32.mrb[0].mxu0
        %v1042 = vpop.f32.mrb[0].mxu0
        %1043 = vdwg.mxu0
        %v1044 = vld [vmem:[#allocation5] sm:$0x3]
        %v1045 = vld [vmem:[#allocation7] sm:$0x3]
        %v1047 = vlaneseq
        %v1048 = vshrl.u32 %v1047, 7
        %v1049 = vsub.s32 0, %v1048
        %v1050 = vrot.slane %v580, %v1049
        %v1052 = vmul.f32 %v1050, %v1044
        %v1054 = vlaneseq
        %v1055 = vshrl.u32 %v1054, 7
        %v1056 = vsub.s32 0, %v1055
        %v1057 = vrot.slane %v583, %v1056
        %v1059 = vmul.f32 %v1057, %v1039
        %v1060 = vadd.f32 %v1052, %v1059
        %vm1061 = vcmask 156672
        %v1062 = vsel %vm1061, %v1060, -inf
        %1063 = vmax.xlane.f32.xlu0 %v1062
        %v1064 = vpop.xlane.xlu0 %1063
        %v1065 = vsub.f32 %v1060, %v1064
        %v1066 = vmul.f32 %v1065, 1.442695
        %v1067 = vpow.pop %v1066
        %v1068 = vsel %vm1061, %v1067, 0.0
        %1069 = vadd.xlane.f32.xlu0 %v1068
        %v1070 = vpop.xlane.xlu0 %1069
        %v1071 = vrcp.pop %v1070
        %v1072 = vmul.f32 %v1067, %v1071
        %v1073 = vadd.f32 %v1045, %v1072
        %v1074 = vmul.f32 %v1050, %v1060
        %v1076 = vrot.slane %v1059, 2
        %v1078 = vadd.f32 %v1074, %v1076
        %v1079 = vsel %vm1061, %v1078, -inf
        %1080 = vmax.xlane.f32.xlu0 %v1079
        %v1081 = vpop.xlane.xlu0 %1080
        %v1082 = vsub.f32 %v1078, %v1081
        %v1083 = vmul.f32 %v1082, 1.442695
        %v1084 = vpow.pop %v1083
        %v1085 = vsel %vm1061, %v1084, 0.0
        %1086 = vadd.xlane.f32.xlu0 %v1085
        %v1087 = vpop.xlane.xlu0 %1086
        %v1088 = vrcp.pop %v1087
        %v1089 = vmul.f32 %v1084, %v1088
        %v1090 = vadd.f32 %v1073, %v1089
        %v1091 = vmul.f32 %v1050, %v1078
        %v1092 = vrot.slane %v1059, 4
        %v1094 = vadd.f32 %v1091, %v1092
        %v1095 = vsel %vm1061, %v1094, -inf
        %1096 = vmax.xlane.f32.xlu0 %v1095
        %v1097 = vpop.xlane.xlu0 %1096
        %v1098 = vsub.f32 %v1094, %v1097
        %v1099 = vmul.f32 %v1098, 1.442695
        %v1100 = vpow.pop %v1099
        %v1101 = vsel %vm1061, %v1100, 0.0
        %1102 = vadd.xlane.f32.xlu0 %v1101
        %v1103 = vpop.xlane.xlu0 %1102
        %v1104 = vrcp.pop %v1103
        %v1105 = vmul.f32 %v1100, %v1104
        %v1106 = vadd.f32 %v1090, %v1105
        %v1107 = vmul.f32 %v1050, %v1094
        %v1108 = vrot.slane %v1059, 6
        %v1110 = vadd.f32 %v1107, %v1108
        %v1111 = vsel %vm1061, %v1110, -inf
        %1112 = vmax.xlane.f32.xlu0 %v1111
        %v1113 = vpop.xlane.xlu0 %1112
        %v1114 = vsub.f32 %v1110, %v1113
        %v1115 = vmul.f32 %v1114, 1.442695
        %v1116 = vpow.pop %v1115
        %v1117 = vsel %vm1061, %v1116, 0.0
        %1118 = vadd.xlane.f32.xlu0 %v1117
        %v1119 = vpop.xlane.xlu0 %1118
        %v1120 = vrcp.pop %v1119
        %v1121 = vmul.f32 %v1116, %v1120
        %v1122 = vadd.f32 %v1106, %v1121
        %1123 = vst.msk [vmem:[#allocation5] sm:$0x3] %vm1061, %v1110
        %1124 = vst.msk [vmem:[#allocation7] sm:$0x3] %vm1061, %v1122
        %p1125 = scmp.eq.s32.totalorder %s31, 1
        // Predicated region
        $region85: #{snn_forward.3} parent=79 // pred_check
          %p1126 = pneg %p1125
        $region86: #{snn_forward.3} parent=79 // pred_check_branch
          %1128 = sbr.rel (%p1126) target = $region88
        $region87: #{snn_forward.3} parent=79 // pred_region
          %v1129 = vld [vmem:[#allocation7] sm:$0x3]
          %1130 = vst.msk [vmem:[#allocation9] sm:$0x3] %vm1061, %v1129
          %v1131 = vld [vmem:[#allocation6] sm:$0x3]
          %v1132 = vsel %vm765, %v1131, 0.0
          %v1133 = vrot.slane %v1132, 4
          %v1134 = vadd.f32 %v1132, %v1133
          %v1135 = vrot.slane %v1134, 2
          %v1136 = vadd.f32 %v1134, %v1135
          %v1137 = vrot.slane %v1136, 1
          %v1138 = vadd.f32 %v1136, %v1137
          %v1139 = vmul.f32 %v1138, 0.0625
          %vm1140 = vcmask 253952
          %1141 = vst.msk [vmem:[#allocation11] sm:$0x1] %vm1140, %v1139
        $region88: #{snn_forward.3} parent=79 // pred_fallthru
          _
        %p1142 = scmp.lt.s32.totalorder %s31, 1
        %s1143 = scalar_select %p1142, %s31, 1
        %s1144 = smul.addr %s1143, 4
        %s1145 = scalar_lea.vmem %s17, %s1144
        // Predicated region
        $region89: #{snn_forward.3} parent=79 // pred_check
          %p1146 = pneg %p364
        $region90: #{snn_forward.3} parent=79 // pred_check_branch
          %1148 = sbr.rel (%p1146) target = $region92
        $region91: #{snn_forward.3} parent=79 // pred_region
          %s1150 = ssub.s32 32, 32
          %1151 = vsyncadd [#allocation10], %s1150
          %s1153 = sshll.u32 [#allocation9], 4
          %s1154 = int_to_ptr.vmem [resolvable:$true] %s1153
          %1156 = dma.vmem_to_hbm [thread:$0]  %s1154, 32, %s15, [#allocation10]
        $region92: #{snn_forward.3} parent=79 // pred_fallthru
          _
        // Predicated region
        $region93: #{snn_forward.3} parent=79 // pred_check
          %p1157 = pneg %p385
        $region94: #{snn_forward.3} parent=79 // pred_check_branch
          %1159 = sbr.rel (%p1157) target = $region96
        $region95: #{snn_forward.3} parent=79 // pred_region
          %s1161 = ssub.s32 16, 16
          %1162 = vsyncadd [#allocation12], %s1161
          %s1164 = sshll.u32 [#allocation11], 4
          %s1165 = int_to_ptr.vmem [resolvable:$true] %s1164
          %1167 = dma.vmem_to_hbm [thread:$0]  %s1165, 16, %s16, [#allocation12]
        $region96: #{snn_forward.3} parent=79 // pred_fallthru
          _
        // Predicated region
        $region97: #{snn_forward.3} parent=79 // pred_check
          %p1168 = pneg %p411
        $region98: #{snn_forward.3} parent=79 // pred_check_branch
          %1170 = sbr.rel (%p1168) target = $region100
        $region99: #{snn_forward.3} parent=79 // pred_region
          _
        $region100: #{snn_forward.3} parent=79 // pred_fallthru
          _
        // Predicated region
        $region101: #{snn_forward.3} parent=79 // pred_check
          %p1171 = pneg %p364
        $region102: #{snn_forward.3} parent=79 // pred_check_branch
          %1173 = sbr.rel (%p1171) target = $region104
        $region103: #{snn_forward.3} parent=79 // pred_region
          %1174 = dma.done [#allocation10], 32
        $region104: #{snn_forward.3} parent=79 // pred_fallthru
          _
        // Predicated region
        $region105: #{snn_forward.3} parent=79 // pred_check
          %p1175 = pneg %p385
        $region106: #{snn_forward.3} parent=79 // pred_check_branch
          %1177 = sbr.rel (%p1175) target = $region108
        $region107: #{snn_forward.3} parent=79 // pred_region
          %1178 = dma.done [#allocation12], 16
        $region108: #{snn_forward.3} parent=79 // pred_fallthru
          _
      $region80: #{snn_forward.3} parent=5 // pred_fallthru
        _
      %p1179 = scmp.le.s32.totalorder 2, %s26
      // Predicated region
      $region109: #{snn_forward.3} parent=5 // pred_check
        %p1180 = pneg %p1179
      $region110: #{snn_forward.3} parent=5 // pred_check_branch
        %1182 = sbr.rel (%p1180) target = $region112
      $region111: #{snn_forward.3} parent=5 // pred_region
        %s1183 = ssub.s32 %s26, 2
        // Predicated region
        $region113: #{snn_forward.3} parent=111 // pred_check
          %p1184 = pneg %p417
        $region114: #{snn_forward.3} parent=111 // pred_check_branch
          %1186 = sbr.rel (%p1184) target = $region116
        $region115: #{snn_forward.3} parent=111 // pred_region
          %p1187 = scmp.lt.s32.totalorder %s32, 1
          %s1188 = scalar_select %p1187, %s32, 1
          %s1189 = smul.addr %s1188, 4
          %s1190 = scalar_lea.vmem %s17, %s1189
        $region116: #{snn_forward.3} parent=111 // pred_fallthru
          _
      $region112: #{snn_forward.3} parent=5 // pred_fallthru
        _
    $region6: #{snn_forward.3} parent=1 // loop_footer
      %s30 = sadd.s32 1, %s26
    $region7: #{snn_forward.3} parent=1 // loop_footer_branch
      %25 = sbr.rel target = $region3
    $region8: #{snn_forward.3} parent=1 // loop_exit
      _
    %1191 = vsyncpa [#allocation10], 1
    %s1192 = scalar_lea.sflag [#allocation10], 1
    %1193 = vsyncpa %s1192, 1
    %1194 = vsyncpa [#allocation12], 1

</llo_original>
